<compile_context>
chip_gen: v5e
topology: v5e:2x2
jax: 0.10.0
libtpu: 0.0.40
codegen_flags: <defaults>
</compile_context>

<pallas_src>
import math
import functools

import jax
import jax.numpy as jnp
from jax.experimental import pallas as pl
from jax.experimental.pallas import tpu as pltpu

LANE = 128  # TPU vreg lane width; padded slab width per projection


# ----------------------------- config & params -----------------------------

class Config:
    vocab_size = 64
    hidden_size = 32
    num_layers = 2
    num_heads = 4
    head_dim = 8          # hidden_size // num_heads
    intermediate_size = 64
    rope_theta = 10000.0
    rms_eps = 1e-6


def init_params(cfg, key):
    """Logical (unpadded) synthetic Llama weights, mirroring the PyTorch module."""
    std = 0.02
    H, I = cfg.hidden_size, cfg.intermediate_size
    V, L = cfg.vocab_size, cfg.num_layers
    ks = jax.random.split(key, 10)

    def nrm(k, shape):
        return jax.random.normal(k, shape, jnp.float32) * std

    return {
        "embed": nrm(ks[0], (V, H)),
        "attn_norm": jnp.ones((L, H), jnp.float32),
        "wq": nrm(ks[1], (L, H, H)),
        "wk": nrm(ks[2], (L, H, H)),
        "wv": nrm(ks[3], (L, H, H)),
        "wo": nrm(ks[4], (L, H, H)),
        "mlp_norm": jnp.ones((L, H), jnp.float32),
        "w_gate": nrm(ks[5], (L, H, I)),
        "w_up": nrm(ks[6], (L, H, I)),
        "w_down": nrm(ks[7], (L, I, H)),
        "final_norm": jnp.ones((H,), jnp.float32),
        "lm_head": nrm(ks[8], (H, V)),
        "value_w": nrm(ks[9], (H, 1)),
        "value_b": jnp.zeros((1,), jnp.float32),
    }


def pack_params(params, cfg):
    """Pack logical weights into the 128-lane-aligned, fused kernel layouts."""
    H, I = cfg.hidden_size, cfg.intermediate_size
    V, L = cfg.vocab_size, cfg.num_layers

    # fused Wq|Wk|Wv at lane-aligned column offsets 0 / 128 / 256 (zero-padded)
    wqkv = jnp.zeros((L, H, 3 * LANE), jnp.float32)
    wqkv = wqkv.at[:, :, 0:H].set(params["wq"])
    wqkv = wqkv.at[:, :, LANE:LANE + H].set(params["wk"])
    wqkv = wqkv.at[:, :, 2 * LANE:2 * LANE + H].set(params["wv"])

    # Wo with the contraction axis zero-padded to 128 rows
    wo = jnp.zeros((L, LANE, H), jnp.float32).at[:, 0:H, :].set(params["wo"])

    # fused Wgate|Wup at lane-aligned column offsets 0 / 128 (zero-padded)
    wgu = jnp.zeros((L, H, 2 * LANE), jnp.float32)
    wgu = wgu.at[:, :, 0:I].set(params["w_gate"])
    wgu = wgu.at[:, :, LANE:LANE + I].set(params["w_up"])

    # Wdown with the contraction axis zero-padded to 128 rows
    wd = jnp.zeros((L, LANE, H), jnp.float32).at[:, 0:I, :].set(params["w_down"])

    # value head folded into lm_head: logits in cols [0,V), value in col V, rest zero
    head_w = jnp.zeros((H, LANE), jnp.float32)
    head_w = head_w.at[:, 0:V].set(params["lm_head"])
    head_w = head_w.at[:, V:V + 1].set(params["value_w"])
    head_b = jnp.zeros((1, LANE), jnp.float32).at[0, V].set(params["value_b"][0])

    return {
        "embed": params["embed"],
        "attn_norm": params["attn_norm"].reshape(L, 1, H),
        "wqkv": wqkv,
        "wo": wo,
        "mlp_norm": params["mlp_norm"].reshape(L, 1, H),
        "wgu": wgu,
        "wd": wd,
        "final_norm": params["final_norm"].reshape(1, H),
        "head_w": head_w,
        "head_b": head_b,
    }


def _rope_constants(cfg, seq_len):
    """cos/sin tiled across heads and zero-padded to (S, 128); block-diagonal
    rotate-half matrix zero-padded to (128, 128)."""
    D, nH, H = cfg.head_dim, cfg.num_heads, cfg.hidden_size
    half = D // 2
    inv_freq = 1.0 / (cfg.rope_theta ** (jnp.arange(0, half, dtype=jnp.float32) / half))
    pos = jnp.arange(seq_len, dtype=jnp.float32)
    freqs = jnp.einsum("s,d->sd", pos, inv_freq)              # (S, half)
    emb = jnp.concatenate([freqs, freqs], axis=-1)            # (S, D)
    cos_h = jnp.tile(jnp.cos(emb), (1, nH))                   # (S, H)
    sin_h = jnp.tile(jnp.sin(emb), (1, nH))                   # (S, H)
    cos_p = jnp.zeros((seq_len, LANE), jnp.float32).at[:, 0:H].set(cos_h)
    sin_p = jnp.zeros((seq_len, LANE), jnp.float32).at[:, 0:H].set(sin_h)

    # per-head rotate-half as a matmul: x @ R == concat([-x[half:], x[:half]])
    eye = jnp.eye(half, dtype=jnp.float32)
    zero = jnp.zeros((half, half), jnp.float32)
    rot_d = jnp.concatenate(
        [jnp.concatenate([zero, eye], axis=1),
         jnp.concatenate([-eye, zero], axis=1)], axis=0)       # (D, D)
    rot_h = jnp.kron(jnp.eye(nH, dtype=jnp.float32), rot_d)    # (H, H) block-diagonal
    rot_p = jnp.zeros((LANE, LANE), jnp.float32).at[0:H, 0:H].set(rot_h)
    return cos_p, sin_p, rot_p


# ----------------------------- fused forward kernel -----------------------------

def _fused_forward_kernel(
        ids_ref, amask_ref, cos_ref, sin_ref, rot_ref, embed_ref,
        anorm_ref, wqkv_ref, wo_ref, mnorm_ref, wgu_ref, wd_ref,
        fnorm_ref, headw_ref, headb_ref, out_ref,
        *, S, H, nH, D, V, L, eps, scale):

    def rmsnorm(x, w):
        var = jnp.mean(x * x, axis=-1, keepdims=True)
        return x * jax.lax.rsqrt(var + eps) * w

    # ----- embedding lookup: one-hot @ embed on the MXU -----
    ids = ids_ref[0]                                               # (S, 1) int32
    tok_iota = jax.lax.broadcasted_iota(jnp.int32, (S, V), 1)
    onehot = (tok_iota == ids).astype(jnp.float32)                 # (S, V)
    h = jnp.dot(onehot, embed_ref[...],
                preferred_element_type=jnp.float32)                # (S, H)

    # ----- causal + padding additive bias, built ONCE per batch element (hoisted) -----
    row = jax.lax.broadcasted_iota(jnp.int32, (S, S), 0)
    col = jax.lax.broadcasted_iota(jnp.int32, (S, S), 1)
    pad = amask_ref[0]                                             # (1, S) f32
    bias = jnp.where(jnp.logical_and(row >= col, pad > 0.5), 0.0, -1e9)

    # ----- per-head 0/1 lane masks over the 128-wide padded slabs (hoisted) -----
    lane = jax.lax.broadcasted_iota(jnp.int32, (1, LANE), 1)
    head_masks = [
        jnp.logical_and(lane >= hh * D, lane < (hh + 1) * D).astype(jnp.float32)
        for hh in range(nH)
    ]

    cos = cos_ref[...]
    sin = sin_ref[...]
    rot = rot_ref[...]

    # ----- transformer layers: statically unrolled in-kernel loop (L small) -----
    for l in range(L):
        # --- attention block ---
        hn = rmsnorm(h, anorm_ref[l])
        qkv = jnp.dot(hn, wqkv_ref[l],
                      preferred_element_type=jnp.float32)          # (S, 3*128)
        q = qkv[:, 0:LANE]                 # lane-aligned 128-wide slabs;
        k = qkv[:, LANE:2 * LANE]          # columns >= H are exactly zero
        v = qkv[:, 2 * LANE:3 * LANE]

        # RoPE once per layer on the whole q / k slab (block-diagonal rotate-half)
        q = q * cos + jnp.dot(q, rot, preferred_element_type=jnp.float32) * sin
        k = k * cos + jnp.dot(k, rot, preferred_element_type=jnp.float32) * sin

        # per-head attention via lane masks: no lane slicing, K/N = 128 on the MXU
        o_acc = jnp.zeros((S, LANE), jnp.float32)
        for hh in range(nH):
            hm = head_masks[hh]                                    # (1, LANE)
            s = jax.lax.dot_general(q * hm, k, (((1,), (1,)), ((), ())),
                                    preferred_element_type=jnp.float32) * scale
            s = s + bias
            m = jnp.max(s, axis=-1, keepdims=True)
            p = jnp.exp(s - m)
            p = p / jnp.sum(p, axis=-1, keepdims=True)             # exact softmax
            o_acc = o_acc + jnp.dot(p, v * hm,
                                    preferred_element_type=jnp.float32)
        # single O-projection matmul over the concatenated (head-packed) outputs
        h = h + jnp.dot(o_acc, wo_ref[l], preferred_element_type=jnp.float32)

        # --- MLP block (SwiGLU), fused lane-aligned gate/up ---
        hn2 = rmsnorm(h, mnorm_ref[l])
        gu = jnp.dot(hn2, wgu_ref[l],
                     preferred_element_type=jnp.float32)           # (S, 2*128)
        g = gu[:, 0:LANE]
        u = gu[:, LANE:2 * LANE]
        act = g * jax.nn.sigmoid(g) * u
        h = h + jnp.dot(act, wd_ref[l], preferred_element_type=jnp.float32)

    # ----- final norm + fused (lm_head | value) head: one lane-dense (S,128) store -----
    hf = rmsnorm(h, fnorm_ref[...])
    out_ref[0] = (jnp.dot(hf, headw_ref[...], preferred_element_type=jnp.float32)
                  + headb_ref[...])


# ----------------------------- wrapper -----------------------------

def forward(packed, input_ids, attention_mask, cfg):
    B, S = input_ids.shape
    H, nH, D = cfg.hidden_size, cfg.num_heads, cfg.head_dim
    V, L = cfg.vocab_size, cfg.num_layers
    scale = 1.0 / math.sqrt(D)

    cos_p, sin_p, rot_p = _rope_constants(cfg, S)

    ids3 = input_ids.astype(jnp.int32).reshape(B, S, 1)
    amask3 = attention_mask.astype(jnp.float32).reshape(B, 1, S)

    kernel = functools.partial(
        _fused_forward_kernel,
        S=S, H=H, nH=nH, D=D, V=V, L=L, eps=cfg.rms_eps, scale=scale)

    batch3 = lambda b: (b, 0, 0)   # per-batch inputs / output
    const2 = lambda b: (0, 0)      # batch-invariant 2-D tensors (fetched once, reused)
    const3 = lambda b: (0, 0, 0)   # stacked (L, ...) weights, fully VMEM-resident

    out = pl.pallas_call(
        kernel,
        out_shape=jax.ShapeDtypeStruct((B, S, LANE), jnp.float32),
        grid_spec=pltpu.PrefetchScalarGridSpec(
            num_scalar_prefetch=0,
            grid=(B,),                                       # layer axis collapsed in-kernel
            in_specs=[
                pl.BlockSpec((1, S, 1), batch3),             # input_ids
                pl.BlockSpec((1, 1, S), batch3),             # attention_mask
                pl.BlockSpec((S, LANE), const2),             # rope cos (padded)
                pl.BlockSpec((S, LANE), const2),             # rope sin (padded)
                pl.BlockSpec((LANE, LANE), const2),          # rotate-half matrix (padded)
                pl.BlockSpec((V, H), const2),                # embedding table
                pl.BlockSpec((L, 1, H), const3),             # attn_norm (all layers)
                pl.BlockSpec((L, H, 3 * LANE), const3),      # fused lane-aligned Wq|Wk|Wv
                pl.BlockSpec((L, LANE, H), const3),          # Wo (rows zero-padded)
                pl.BlockSpec((L, 1, H), const3),             # mlp_norm
                pl.BlockSpec((L, H, 2 * LANE), const3),      # fused lane-aligned Wgate|Wup
                pl.BlockSpec((L, LANE, H), const3),          # Wdown (rows zero-padded)
                pl.BlockSpec((1, H), const2),                # final_norm
                pl.BlockSpec((H, LANE), const2),             # fused lm_head | value_w
                pl.BlockSpec((1, LANE), const2),             # fused head bias
            ],
            out_specs=pl.BlockSpec((1, S, LANE), batch3),    # lane-dense (S,128) output
        ),
        compiler_params=pltpu.CompilerParams(
            dimension_semantics=("parallel",)),              # batch across TCs on v7x
    )(
        ids3, amask3, cos_p, sin_p, rot_p,
        packed["embed"], packed["attn_norm"], packed["wqkv"], packed["wo"],
        packed["mlp_norm"], packed["wgu"], packed["wd"],
        packed["final_norm"], packed["head_w"], packed["head_b"],
    )

    logits = out[:, :, :V]
    # Matches the PyTorch reference exactly: value head applied to the literal last
    # sequence position of the final (post-norm) hidden state.
    value = out[:, -1, V]
    return logits, value


# ----------------------------- main -----------------------------

if __name__ == "__main__":
    cfg = Config()
    key = jax.random.PRNGKey(0)
    k_param, k_ids = jax.random.split(key)

    params = init_params(cfg, k_param)
    packed = pack_params(params, cfg)

    B, S = 2, 8
    input_ids = jax.random.randint(k_ids, (B, S), 0, cfg.vocab_size, dtype=jnp.int32)
    attention_mask = jnp.ones((B, S), dtype=jnp.int32)

    fwd = jax.jit(functools.partial(forward, cfg=cfg))
    logits, value = fwd(packed, input_ids, attention_mask)
    jax.block_until_ready((logits, value))

    assert logits.shape == (B, S, cfg.vocab_size)
    assert value.shape == (B,)
    assert bool(jnp.all(jnp.isfinite(logits))) and bool(jnp.all(jnp.isfinite(value)))
    print("KERNEL_OK")
</pallas_src>

<mosaic_0001>
module attributes {stable_mosaic.version = 11 : i64} {
  func.func @_fused_forward_kernel(%arg0: i32, %arg1: memref<1x8x1xi32, #tpu.memory_space<vmem>>, %arg2: memref<1x1x8xf32, #tpu.memory_space<vmem>>, %arg3: memref<8x128xf32, #tpu.memory_space<vmem>>, %arg4: memref<8x128xf32, #tpu.memory_space<vmem>>, %arg5: memref<128x128xf32, #tpu.memory_space<vmem>>, %arg6: memref<64x32xf32, #tpu.memory_space<vmem>>, %arg7: memref<2x1x32xf32, #tpu.memory_space<vmem>>, %arg8: memref<2x32x384xf32, #tpu.memory_space<vmem>>, %arg9: memref<2x128x32xf32, #tpu.memory_space<vmem>>, %arg10: memref<2x1x32xf32, #tpu.memory_space<vmem>>, %arg11: memref<2x32x256xf32, #tpu.memory_space<vmem>>, %arg12: memref<2x128x32xf32, #tpu.memory_space<vmem>>, %arg13: memref<1x32xf32, #tpu.memory_space<vmem>>, %arg14: memref<32x128xf32, #tpu.memory_space<vmem>>, %arg15: memref<1x128xf32, #tpu.memory_space<vmem>>, %arg16: memref<1x8x128xf32, #tpu.memory_space<vmem>>) attributes {dimension_semantics = [#tpu.dimension_semantics<parallel>], iteration_bounds = array<i64: 2>, scalar_prefetch = 0 : i64, scratch_operands = 0 : i64, tpu.core_type = #tpu.core_type<tc>, window_params = [{transform_indices = @transform_0, window_bounds = array<i64: 1, 8, 1>}, {transform_indices = @transform_1, window_bounds = array<i64: 1, 1, 8>}, {pipeline_mode = #tpu.pipeline_mode<synchronous>, transform_indices = @transform_2, window_bounds = array<i64: 8, 128>}, {pipeline_mode = #tpu.pipeline_mode<synchronous>, transform_indices = @transform_3, window_bounds = array<i64: 8, 128>}, {pipeline_mode = #tpu.pipeline_mode<synchronous>, transform_indices = @transform_4, window_bounds = array<i64: 128, 128>}, {pipeline_mode = #tpu.pipeline_mode<synchronous>, transform_indices = @transform_5, window_bounds = array<i64: 64, 32>}, {pipeline_mode = #tpu.pipeline_mode<synchronous>, transform_indices = @transform_6, window_bounds = array<i64: 2, 1, 32>}, {pipeline_mode = #tpu.pipeline_mode<synchronous>, transform_indices = @transform_7, window_bounds = array<i64: 2, 32, 384>}, {pipeline_mode = #tpu.pipeline_mode<synchronous>, transform_indices = @transform_8, window_bounds = array<i64: 2, 128, 32>}, {pipeline_mode = #tpu.pipeline_mode<synchronous>, transform_indices = @transform_9, window_bounds = array<i64: 2, 1, 32>}, {pipeline_mode = #tpu.pipeline_mode<synchronous>, transform_indices = @transform_10, window_bounds = array<i64: 2, 32, 256>}, {pipeline_mode = #tpu.pipeline_mode<synchronous>, transform_indices = @transform_11, window_bounds = array<i64: 2, 128, 32>}, {pipeline_mode = #tpu.pipeline_mode<synchronous>, transform_indices = @transform_12, window_bounds = array<i64: 1, 32>}, {pipeline_mode = #tpu.pipeline_mode<synchronous>, transform_indices = @transform_13, window_bounds = array<i64: 32, 128>}, {pipeline_mode = #tpu.pipeline_mode<synchronous>, transform_indices = @transform_14, window_bounds = array<i64: 1, 128>}, {transform_indices = @transform_15, window_bounds = array<i64: 1, 8, 128>}]} {
    %c0 = arith.constant 0 : index
    %c0_0 = arith.constant 0 : index
    %c0_1 = arith.constant 0 : index
    %0 = vector.load %arg1[%c0, %c0_0, %c0_1] : memref<1x8x1xi32, #tpu.memory_space<vmem>>, vector<1x8x1xi32>
    %1 = vector.shape_cast %0 : vector<1x8x1xi32> to vector<8x1xi32>
    %2 = tpu.iota {dimensions = array<i32: 1>} : vector<8x64xi32>
    %3 = vector.broadcast %1 : vector<8x1xi32> to vector<8x64xi32>
    %4 = arith.cmpi eq, %2, %3 : vector<8x64xi32>
    %5 = arith.extui %4 : vector<8x64xi1> to vector<8x64xi32>
    %6 = arith.sitofp %5 : vector<8x64xi32> to vector<8x64xf32>
    %c0_2 = arith.constant 0 : index
    %c0_3 = arith.constant 0 : index
    %7 = vector.load %arg6[%c0_2, %c0_3] : memref<64x32xf32, #tpu.memory_space<vmem>>, vector<64x32xf32>
    %cst = arith.constant dense<0.000000e+00> : vector<8x32xf32>
    %8 = tpu.matmul %6, %7, %cst {dimension_numbers = #tpu.dot_dimension_numbers<[1], [0], [0], [1], [0, 0, 1, 1], [], []>} : vector<8x64xf32>, vector<64x32xf32>, vector<8x32xf32> -> vector<8x32xf32>
    %9 = tpu.iota {dimensions = array<i32: 0>} : vector<8x8xi32>
    %10 = tpu.iota {dimensions = array<i32: 1>} : vector<8x8xi32>
    %c0_4 = arith.constant 0 : index
    %c0_5 = arith.constant 0 : index
    %c0_6 = arith.constant 0 : index
    %11 = vector.load %arg2[%c0_4, %c0_5, %c0_6] : memref<1x1x8xf32, #tpu.memory_space<vmem>>, vector<1x1x8xf32>
    %12 = vector.shape_cast %11 : vector<1x1x8xf32> to vector<1x8xf32>
    %13 = arith.cmpi sge, %9, %10 : vector<8x8xi32>
    %cst_7 = arith.constant 5.000000e-01 : f32
    %14 = vector.broadcast %cst_7 : f32 to vector<1x8xf32>
    %15 = arith.cmpf ogt, %12, %14 : vector<1x8xf32>
    %16 = vector.broadcast %15 : vector<1x8xi1> to vector<8x8xi1>
    %17 = arith.andi %13, %16 : vector<8x8xi1>
    %cst_8 = arith.constant 0.000000e+00 : f32
    %cst_9 = arith.constant -1.000000e+09 : f32
    %18 = vector.broadcast %cst_8 : f32 to vector<8x8xf32>
    %19 = vector.broadcast %cst_9 : f32 to vector<8x8xf32>
    %20 = arith.select %17, %18, %19 : vector<8x8xi1>, vector<8x8xf32>
    %21 = tpu.iota {dimensions = array<i32: 1>} : vector<1x128xi32>
    %c0_i32 = arith.constant 0 : i32
    %22 = vector.broadcast %c0_i32 : i32 to vector<1x128xi32>
    %23 = arith.cmpi sge, %21, %22 : vector<1x128xi32>
    %c8_i32 = arith.constant 8 : i32
    %24 = vector.broadcast %c8_i32 : i32 to vector<1x128xi32>
    %25 = arith.cmpi slt, %21, %24 : vector<1x128xi32>
    %26 = arith.andi %23, %25 : vector<1x128xi1>
    %27 = arith.extui %26 : vector<1x128xi1> to vector<1x128xi32>
    %28 = arith.sitofp %27 : vector<1x128xi32> to vector<1x128xf32>
    %c8_i32_10 = arith.constant 8 : i32
    %29 = vector.broadcast %c8_i32_10 : i32 to vector<1x128xi32>
    %30 = arith.cmpi sge, %21, %29 : vector<1x128xi32>
    %c16_i32 = arith.constant 16 : i32
    %31 = vector.broadcast %c16_i32 : i32 to vector<1x128xi32>
    %32 = arith.cmpi slt, %21, %31 : vector<1x128xi32>
    %33 = arith.andi %30, %32 : vector<1x128xi1>
    %34 = arith.extui %33 : vector<1x128xi1> to vector<1x128xi32>
    %35 = arith.sitofp %34 : vector<1x128xi32> to vector<1x128xf32>
    %c16_i32_11 = arith.constant 16 : i32
    %36 = vector.broadcast %c16_i32_11 : i32 to vector<1x128xi32>
    %37 = arith.cmpi sge, %21, %36 : vector<1x128xi32>
    %c24_i32 = arith.constant 24 : i32
    %38 = vector.broadcast %c24_i32 : i32 to vector<1x128xi32>
    %39 = arith.cmpi slt, %21, %38 : vector<1x128xi32>
    %40 = arith.andi %37, %39 : vector<1x128xi1>
    %41 = arith.extui %40 : vector<1x128xi1> to vector<1x128xi32>
    %42 = arith.sitofp %41 : vector<1x128xi32> to vector<1x128xf32>
    %c24_i32_12 = arith.constant 24 : i32
    %43 = vector.broadcast %c24_i32_12 : i32 to vector<1x128xi32>
    %44 = arith.cmpi sge, %21, %43 : vector<1x128xi32>
    %c32_i32 = arith.constant 32 : i32
    %45 = vector.broadcast %c32_i32 : i32 to vector<1x128xi32>
    %46 = arith.cmpi slt, %21, %45 : vector<1x128xi32>
    %47 = arith.andi %44, %46 : vector<1x128xi1>
    %48 = arith.extui %47 : vector<1x128xi1> to vector<1x128xi32>
    %49 = arith.sitofp %48 : vector<1x128xi32> to vector<1x128xf32>
    %c0_13 = arith.constant 0 : index
    %c0_14 = arith.constant 0 : index
    %50 = vector.load %arg3[%c0_13, %c0_14] : memref<8x128xf32, #tpu.memory_space<vmem>>, vector<8x128xf32>
    %c0_15 = arith.constant 0 : index
    %c0_16 = arith.constant 0 : index
    %51 = vector.load %arg4[%c0_15, %c0_16] : memref<8x128xf32, #tpu.memory_space<vmem>>, vector<8x128xf32>
    %c0_17 = arith.constant 0 : index
    %c0_18 = arith.constant 0 : index
    %52 = vector.load %arg5[%c0_17, %c0_18] : memref<128x128xf32, #tpu.memory_space<vmem>>, vector<128x128xf32>
    %c0_19 = arith.constant 0 : index
    %c0_20 = arith.constant 0 : index
    %c0_21 = arith.constant 0 : index
    %53 = vector.load %arg7[%c0_19, %c0_20, %c0_21] : memref<2x1x32xf32, #tpu.memory_space<vmem>>, vector<1x1x32xf32>
    %54 = vector.shape_cast %53 : vector<1x1x32xf32> to vector<1x32xf32>
    %55 = arith.mulf %8, %8 : vector<8x32xf32>
    %cst_22 = arith.constant dense<0.000000e+00> : vector<8xf32>
    %56 = vector.multi_reduction <add>, %55, %cst_22 [1] : vector<8x32xf32> to vector<8xf32>
    %57 = vector.shape_cast %56 : vector<8xf32> to vector<8x1xf32>
    %cst_23 = arith.constant 3.200000e+01 : f32
    %58 = vector.broadcast %cst_23 : f32 to vector<8x1xf32>
    %59 = arith.divf %57, %58 : vector<8x1xf32>
    %cst_24 = arith.constant 9.99999997E-7 : f32
    %60 = vector.broadcast %cst_24 : f32 to vector<8x1xf32>
    %61 = arith.addf %59, %60 : vector<8x1xf32>
    %62 = math.rsqrt %61 : vector<8x1xf32>
    %63 = vector.broadcast %62 : vector<8x1xf32> to vector<8x32xf32>
    %64 = arith.mulf %8, %63 : vector<8x32xf32>
    %65 = vector.broadcast %54 : vector<1x32xf32> to vector<8x32xf32>
    %66 = arith.mulf %64, %65 : vector<8x32xf32>
    %c0_25 = arith.constant 0 : index
    %c0_26 = arith.constant 0 : index
    %c0_27 = arith.constant 0 : index
    %67 = vector.load %arg8[%c0_25, %c0_26, %c0_27] : memref<2x32x384xf32, #tpu.memory_space<vmem>>, vector<1x32x384xf32>
    %68 = vector.shape_cast %67 : vector<1x32x384xf32> to vector<32x384xf32>
    %cst_28 = arith.constant dense<0.000000e+00> : vector<8x384xf32>
    %69 = tpu.matmul %66, %68, %cst_28 {dimension_numbers = #tpu.dot_dimension_numbers<[1], [0], [0], [1], [0, 0, 1, 1], [], []>} : vector<8x32xf32>, vector<32x384xf32>, vector<8x384xf32> -> vector<8x384xf32>
    %70 = vector.extract_strided_slice %69 {offsets = [0, 0], sizes = [8, 128], strides = [1, 1]} : vector<8x384xf32> to vector<8x128xf32>
    %71 = vector.extract_strided_slice %69 {offsets = [0, 128], sizes = [8, 128], strides = [1, 1]} : vector<8x384xf32> to vector<8x128xf32>
    %72 = vector.extract_strided_slice %69 {offsets = [0, 256], sizes = [8, 128], strides = [1, 1]} : vector<8x384xf32> to vector<8x128xf32>
    %73 = arith.mulf %70, %50 : vector<8x128xf32>
    %cst_29 = arith.constant dense<0.000000e+00> : vector<8x128xf32>
    %74 = tpu.matmul %70, %52, %cst_29 {dimension_numbers = #tpu.dot_dimension_numbers<[1], [0], [0], [1], [0, 0, 1, 1], [], []>} : vector<8x128xf32>, vector<128x128xf32>, vector<8x128xf32> -> vector<8x128xf32>
    %75 = arith.mulf %74, %51 : vector<8x128xf32>
    %76 = arith.addf %73, %75 : vector<8x128xf32>
    %77 = arith.mulf %71, %50 : vector<8x128xf32>
    %cst_30 = arith.constant dense<0.000000e+00> : vector<8x128xf32>
    %78 = tpu.matmul %71, %52, %cst_30 {dimension_numbers = #tpu.dot_dimension_numbers<[1], [0], [0], [1], [0, 0, 1, 1], [], []>} : vector<8x128xf32>, vector<128x128xf32>, vector<8x128xf32> -> vector<8x128xf32>
    %79 = arith.mulf %78, %51 : vector<8x128xf32>
    %80 = arith.addf %77, %79 : vector<8x128xf32>
    %cst_31 = arith.constant 0.000000e+00 : f32
    %81 = vector.broadcast %cst_31 : f32 to vector<8x128xf32>
    %82 = vector.broadcast %28 : vector<1x128xf32> to vector<8x128xf32>
    %83 = arith.mulf %76, %82 : vector<8x128xf32>
    %cst_32 = arith.constant dense<0.000000e+00> : vector<8x8xf32>
    %84 = tpu.matmul %83, %80, %cst_32 {dimension_numbers = #tpu.dot_dimension_numbers<[1], [1], [0], [0], [0, 0, 1, 0], [], []>} : vector<8x128xf32>, vector<8x128xf32>, vector<8x8xf32> -> vector<8x8xf32>
    %cst_33 = arith.constant 0.353553385 : f32
    %85 = vector.broadcast %cst_33 : f32 to vector<8x8xf32>
    %86 = arith.mulf %84, %85 : vector<8x8xf32>
    %87 = arith.addf %86, %20 : vector<8x8xf32>
    %cst_34 = arith.constant dense<0xFF800000> : vector<8xf32>
    %88 = vector.multi_reduction <maximumf>, %87, %cst_34 [1] : vector<8x8xf32> to vector<8xf32>
    %89 = vector.shape_cast %88 : vector<8xf32> to vector<8x1xf32>
    %90 = vector.broadcast %89 : vector<8x1xf32> to vector<8x8xf32>
    %91 = arith.subf %87, %90 : vector<8x8xf32>
    %92 = math.exp %91 : vector<8x8xf32>
    %cst_35 = arith.constant dense<0.000000e+00> : vector<8xf32>
    %93 = vector.multi_reduction <add>, %92, %cst_35 [1] : vector<8x8xf32> to vector<8xf32>
    %94 = vector.shape_cast %93 : vector<8xf32> to vector<8x1xf32>
    %95 = vector.broadcast %94 : vector<8x1xf32> to vector<8x8xf32>
    %96 = arith.divf %92, %95 : vector<8x8xf32>
    %97 = vector.broadcast %28 : vector<1x128xf32> to vector<8x128xf32>
    %98 = arith.mulf %72, %97 : vector<8x128xf32>
    %cst_36 = arith.constant dense<0.000000e+00> : vector<8x128xf32>
    %99 = tpu.matmul %96, %98, %cst_36 {dimension_numbers = #tpu.dot_dimension_numbers<[1], [0], [0], [1], [0, 0, 1, 1], [], []>} : vector<8x8xf32>, vector<8x128xf32>, vector<8x128xf32> -> vector<8x128xf32>
    %100 = arith.addf %81, %99 : vector<8x128xf32>
    %101 = vector.broadcast %35 : vector<1x128xf32> to vector<8x128xf32>
    %102 = arith.mulf %76, %101 : vector<8x128xf32>
    %cst_37 = arith.constant dense<0.000000e+00> : vector<8x8xf32>
    %103 = tpu.matmul %102, %80, %cst_37 {dimension_numbers = #tpu.dot_dimension_numbers<[1], [1], [0], [0], [0, 0, 1, 0], [], []>} : vector<8x128xf32>, vector<8x128xf32>, vector<8x8xf32> -> vector<8x8xf32>
    %cst_38 = arith.constant 0.353553385 : f32
    %104 = vector.broadcast %cst_38 : f32 to vector<8x8xf32>
    %105 = arith.mulf %103, %104 : vector<8x8xf32>
    %106 = arith.addf %105, %20 : vector<8x8xf32>
    %cst_39 = arith.constant dense<0xFF800000> : vector<8xf32>
    %107 = vector.multi_reduction <maximumf>, %106, %cst_39 [1] : vector<8x8xf32> to vector<8xf32>
    %108 = vector.shape_cast %107 : vector<8xf32> to vector<8x1xf32>
    %109 = vector.broadcast %108 : vector<8x1xf32> to vector<8x8xf32>
    %110 = arith.subf %106, %109 : vector<8x8xf32>
    %111 = math.exp %110 : vector<8x8xf32>
    %cst_40 = arith.constant dense<0.000000e+00> : vector<8xf32>
    %112 = vector.multi_reduction <add>, %111, %cst_40 [1] : vector<8x8xf32> to vector<8xf32>
    %113 = vector.shape_cast %112 : vector<8xf32> to vector<8x1xf32>
    %114 = vector.broadcast %113 : vector<8x1xf32> to vector<8x8xf32>
    %115 = arith.divf %111, %114 : vector<8x8xf32>
    %116 = vector.broadcast %35 : vector<1x128xf32> to vector<8x128xf32>
    %117 = arith.mulf %72, %116 : vector<8x128xf32>
    %cst_41 = arith.constant dense<0.000000e+00> : vector<8x128xf32>
    %118 = tpu.matmul %115, %117, %cst_41 {dimension_numbers = #tpu.dot_dimension_numbers<[1], [0], [0], [1], [0, 0, 1, 1], [], []>} : vector<8x8xf32>, vector<8x128xf32>, vector<8x128xf32> -> vector<8x128xf32>
    %119 = arith.addf %100, %118 : vector<8x128xf32>
    %120 = vector.broadcast %42 : vector<1x128xf32> to vector<8x128xf32>
    %121 = arith.mulf %76, %120 : vector<8x128xf32>
    %cst_42 = arith.constant dense<0.000000e+00> : vector<8x8xf32>
    %122 = tpu.matmul %121, %80, %cst_42 {dimension_numbers = #tpu.dot_dimension_numbers<[1], [1], [0], [0], [0, 0, 1, 0], [], []>} : vector<8x128xf32>, vector<8x128xf32>, vector<8x8xf32> -> vector<8x8xf32>
    %cst_43 = arith.constant 0.353553385 : f32
    %123 = vector.broadcast %cst_43 : f32 to vector<8x8xf32>
    %124 = arith.mulf %122, %123 : vector<8x8xf32>
    %125 = arith.addf %124, %20 : vector<8x8xf32>
    %cst_44 = arith.constant dense<0xFF800000> : vector<8xf32>
    %126 = vector.multi_reduction <maximumf>, %125, %cst_44 [1] : vector<8x8xf32> to vector<8xf32>
    %127 = vector.shape_cast %126 : vector<8xf32> to vector<8x1xf32>
    %128 = vector.broadcast %127 : vector<8x1xf32> to vector<8x8xf32>
    %129 = arith.subf %125, %128 : vector<8x8xf32>
    %130 = math.exp %129 : vector<8x8xf32>
    %cst_45 = arith.constant dense<0.000000e+00> : vector<8xf32>
    %131 = vector.multi_reduction <add>, %130, %cst_45 [1] : vector<8x8xf32> to vector<8xf32>
    %132 = vector.shape_cast %131 : vector<8xf32> to vector<8x1xf32>
    %133 = vector.broadcast %132 : vector<8x1xf32> to vector<8x8xf32>
    %134 = arith.divf %130, %133 : vector<8x8xf32>
    %135 = vector.broadcast %42 : vector<1x128xf32> to vector<8x128xf32>
    %136 = arith.mulf %72, %135 : vector<8x128xf32>
    %cst_46 = arith.constant dense<0.000000e+00> : vector<8x128xf32>
    %137 = tpu.matmul %134, %136, %cst_46 {dimension_numbers = #tpu.dot_dimension_numbers<[1], [0], [0], [1], [0, 0, 1, 1], [], []>} : vector<8x8xf32>, vector<8x128xf32>, vector<8x128xf32> -> vector<8x128xf32>
    %138 = arith.addf %119, %137 : vector<8x128xf32>
    %139 = vector.broadcast %49 : vector<1x128xf32> to vector<8x128xf32>
    %140 = arith.mulf %76, %139 : vector<8x128xf32>
    %cst_47 = arith.constant dense<0.000000e+00> : vector<8x8xf32>
    %141 = tpu.matmul %140, %80, %cst_47 {dimension_numbers = #tpu.dot_dimension_numbers<[1], [1], [0], [0], [0, 0, 1, 0], [], []>} : vector<8x128xf32>, vector<8x128xf32>, vector<8x8xf32> -> vector<8x8xf32>
    %cst_48 = arith.constant 0.353553385 : f32
    %142 = vector.broadcast %cst_48 : f32 to vector<8x8xf32>
    %143 = arith.mulf %141, %142 : vector<8x8xf32>
    %144 = arith.addf %143, %20 : vector<8x8xf32>
    %cst_49 = arith.constant dense<0xFF800000> : vector<8xf32>
    %145 = vector.multi_reduction <maximumf>, %144, %cst_49 [1] : vector<8x8xf32> to vector<8xf32>
    %146 = vector.shape_cast %145 : vector<8xf32> to vector<8x1xf32>
    %147 = vector.broadcast %146 : vector<8x1xf32> to vector<8x8xf32>
    %148 = arith.subf %144, %147 : vector<8x8xf32>
    %149 = math.exp %148 : vector<8x8xf32>
    %cst_50 = arith.constant dense<0.000000e+00> : vector<8xf32>
    %150 = vector.multi_reduction <add>, %149, %cst_50 [1] : vector<8x8xf32> to vector<8xf32>
    %151 = vector.shape_cast %150 : vector<8xf32> to vector<8x1xf32>
    %152 = vector.broadcast %151 : vector<8x1xf32> to vector<8x8xf32>
    %153 = arith.divf %149, %152 : vector<8x8xf32>
    %154 = vector.broadcast %49 : vector<1x128xf32> to vector<8x128xf32>
    %155 = arith.mulf %72, %154 : vector<8x128xf32>
    %cst_51 = arith.constant dense<0.000000e+00> : vector<8x128xf32>
    %156 = tpu.matmul %153, %155, %cst_51 {dimension_numbers = #tpu.dot_dimension_numbers<[1], [0], [0], [1], [0, 0, 1, 1], [], []>} : vector<8x8xf32>, vector<8x128xf32>, vector<8x128xf32> -> vector<8x128xf32>
    %157 = arith.addf %138, %156 : vector<8x128xf32>
    %c0_52 = arith.constant 0 : index
    %c0_53 = arith.constant 0 : index
    %c0_54 = arith.constant 0 : index
    %158 = vector.load %arg9[%c0_52, %c0_53, %c0_54] : memref<2x128x32xf32, #tpu.memory_space<vmem>>, vector<1x128x32xf32>
    %159 = vector.shape_cast %158 : vector<1x128x32xf32> to vector<128x32xf32>
    %cst_55 = arith.constant dense<0.000000e+00> : vector<8x32xf32>
    %160 = tpu.matmul %157, %159, %cst_55 {dimension_numbers = #tpu.dot_dimension_numbers<[1], [0], [0], [1], [0, 0, 1, 1], [], []>} : vector<8x128xf32>, vector<128x32xf32>, vector<8x32xf32> -> vector<8x32xf32>
    %161 = arith.addf %8, %160 : vector<8x32xf32>
    %c0_56 = arith.constant 0 : index
    %c0_57 = arith.constant 0 : index
    %c0_58 = arith.constant 0 : index
    %162 = vector.load %arg10[%c0_56, %c0_57, %c0_58] : memref<2x1x32xf32, #tpu.memory_space<vmem>>, vector<1x1x32xf32>
    %163 = vector.shape_cast %162 : vector<1x1x32xf32> to vector<1x32xf32>
    %164 = arith.mulf %161, %161 : vector<8x32xf32>
    %cst_59 = arith.constant dense<0.000000e+00> : vector<8xf32>
    %165 = vector.multi_reduction <add>, %164, %cst_59 [1] : vector<8x32xf32> to vector<8xf32>
    %166 = vector.shape_cast %165 : vector<8xf32> to vector<8x1xf32>
    %cst_60 = arith.constant 3.200000e+01 : f32
    %167 = vector.broadcast %cst_60 : f32 to vector<8x1xf32>
    %168 = arith.divf %166, %167 : vector<8x1xf32>
    %cst_61 = arith.constant 9.99999997E-7 : f32
    %169 = vector.broadcast %cst_61 : f32 to vector<8x1xf32>
    %170 = arith.addf %168, %169 : vector<8x1xf32>
    %171 = math.rsqrt %170 : vector<8x1xf32>
    %172 = vector.broadcast %171 : vector<8x1xf32> to vector<8x32xf32>
    %173 = arith.mulf %161, %172 : vector<8x32xf32>
    %174 = vector.broadcast %163 : vector<1x32xf32> to vector<8x32xf32>
    %175 = arith.mulf %173, %174 : vector<8x32xf32>
    %c0_62 = arith.constant 0 : index
    %c0_63 = arith.constant 0 : index
    %c0_64 = arith.constant 0 : index
    %176 = vector.load %arg11[%c0_62, %c0_63, %c0_64] : memref<2x32x256xf32, #tpu.memory_space<vmem>>, vector<1x32x256xf32>
    %177 = vector.shape_cast %176 : vector<1x32x256xf32> to vector<32x256xf32>
    %cst_65 = arith.constant dense<0.000000e+00> : vector<8x256xf32>
    %178 = tpu.matmul %175, %177, %cst_65 {dimension_numbers = #tpu.dot_dimension_numbers<[1], [0], [0], [1], [0, 0, 1, 1], [], []>} : vector<8x32xf32>, vector<32x256xf32>, vector<8x256xf32> -> vector<8x256xf32>
    %179 = vector.extract_strided_slice %178 {offsets = [0, 0], sizes = [8, 128], strides = [1, 1]} : vector<8x256xf32> to vector<8x128xf32>
    %180 = vector.extract_strided_slice %178 {offsets = [0, 128], sizes = [8, 128], strides = [1, 1]} : vector<8x256xf32> to vector<8x128xf32>
    %181 = arith.negf %179 : vector<8x128xf32>
    %182 = math.exp %181 : vector<8x128xf32>
    %cst_66 = arith.constant 1.000000e+00 : f32
    %183 = vector.broadcast %cst_66 : f32 to vector<8x128xf32>
    %184 = arith.addf %183, %182 : vector<8x128xf32>
    %185 = arith.divf %183, %184 : vector<8x128xf32>
    %186 = arith.mulf %179, %185 : vector<8x128xf32>
    %187 = arith.mulf %186, %180 : vector<8x128xf32>
    %c0_67 = arith.constant 0 : index
    %c0_68 = arith.constant 0 : index
    %c0_69 = arith.constant 0 : index
    %188 = vector.load %arg12[%c0_67, %c0_68, %c0_69] : memref<2x128x32xf32, #tpu.memory_space<vmem>>, vector<1x128x32xf32>
    %189 = vector.shape_cast %188 : vector<1x128x32xf32> to vector<128x32xf32>
    %cst_70 = arith.constant dense<0.000000e+00> : vector<8x32xf32>
    %190 = tpu.matmul %187, %189, %cst_70 {dimension_numbers = #tpu.dot_dimension_numbers<[1], [0], [0], [1], [0, 0, 1, 1], [], []>} : vector<8x128xf32>, vector<128x32xf32>, vector<8x32xf32> -> vector<8x32xf32>
    %191 = arith.addf %161, %190 : vector<8x32xf32>
    %c1 = arith.constant 1 : index
    %c0_71 = arith.constant 0 : index
    %c0_72 = arith.constant 0 : index
    %192 = vector.load %arg7[%c1, %c0_71, %c0_72] : memref<2x1x32xf32, #tpu.memory_space<vmem>>, vector<1x1x32xf32>
    %193 = vector.shape_cast %192 : vector<1x1x32xf32> to vector<1x32xf32>
    %194 = arith.mulf %191, %191 : vector<8x32xf32>
    %cst_73 = arith.constant dense<0.000000e+00> : vector<8xf32>
    %195 = vector.multi_reduction <add>, %194, %cst_73 [1] : vector<8x32xf32> to vector<8xf32>
    %196 = vector.shape_cast %195 : vector<8xf32> to vector<8x1xf32>
    %cst_74 = arith.constant 3.200000e+01 : f32
    %197 = vector.broadcast %cst_74 : f32 to vector<8x1xf32>
    %198 = arith.divf %196, %197 : vector<8x1xf32>
    %cst_75 = arith.constant 9.99999997E-7 : f32
    %199 = vector.broadcast %cst_75 : f32 to vector<8x1xf32>
    %200 = arith.addf %198, %199 : vector<8x1xf32>
    %201 = math.rsqrt %200 : vector<8x1xf32>
    %202 = vector.broadcast %201 : vector<8x1xf32> to vector<8x32xf32>
    %203 = arith.mulf %191, %202 : vector<8x32xf32>
    %204 = vector.broadcast %193 : vector<1x32xf32> to vector<8x32xf32>
    %205 = arith.mulf %203, %204 : vector<8x32xf32>
    %c1_76 = arith.constant 1 : index
    %c0_77 = arith.constant 0 : index
    %c0_78 = arith.constant 0 : index
    %206 = vector.load %arg8[%c1_76, %c0_77, %c0_78] : memref<2x32x384xf32, #tpu.memory_space<vmem>>, vector<1x32x384xf32>
    %207 = vector.shape_cast %206 : vector<1x32x384xf32> to vector<32x384xf32>
    %cst_79 = arith.constant dense<0.000000e+00> : vector<8x384xf32>
    %208 = tpu.matmul %205, %207, %cst_79 {dimension_numbers = #tpu.dot_dimension_numbers<[1], [0], [0], [1], [0, 0, 1, 1], [], []>} : vector<8x32xf32>, vector<32x384xf32>, vector<8x384xf32> -> vector<8x384xf32>
    %209 = vector.extract_strided_slice %208 {offsets = [0, 0], sizes = [8, 128], strides = [1, 1]} : vector<8x384xf32> to vector<8x128xf32>
    %210 = vector.extract_strided_slice %208 {offsets = [0, 128], sizes = [8, 128], strides = [1, 1]} : vector<8x384xf32> to vector<8x128xf32>
    %211 = vector.extract_strided_slice %208 {offsets = [0, 256], sizes = [8, 128], strides = [1, 1]} : vector<8x384xf32> to vector<8x128xf32>
    %212 = arith.mulf %209, %50 : vector<8x128xf32>
    %cst_80 = arith.constant dense<0.000000e+00> : vector<8x128xf32>
    %213 = tpu.matmul %209, %52, %cst_80 {dimension_numbers = #tpu.dot_dimension_numbers<[1], [0], [0], [1], [0, 0, 1, 1], [], []>} : vector<8x128xf32>, vector<128x128xf32>, vector<8x128xf32> -> vector<8x128xf32>
    %214 = arith.mulf %213, %51 : vector<8x128xf32>
    %215 = arith.addf %212, %214 : vector<8x128xf32>
    %216 = arith.mulf %210, %50 : vector<8x128xf32>
    %cst_81 = arith.constant dense<0.000000e+00> : vector<8x128xf32>
    %217 = tpu.matmul %210, %52, %cst_81 {dimension_numbers = #tpu.dot_dimension_numbers<[1], [0], [0], [1], [0, 0, 1, 1], [], []>} : vector<8x128xf32>, vector<128x128xf32>, vector<8x128xf32> -> vector<8x128xf32>
    %218 = arith.mulf %217, %51 : vector<8x128xf32>
    %219 = arith.addf %216, %218 : vector<8x128xf32>
    %cst_82 = arith.constant 0.000000e+00 : f32
    %220 = vector.broadcast %cst_82 : f32 to vector<8x128xf32>
    %221 = vector.broadcast %28 : vector<1x128xf32> to vector<8x128xf32>
    %222 = arith.mulf %215, %221 : vector<8x128xf32>
    %cst_83 = arith.constant dense<0.000000e+00> : vector<8x8xf32>
    %223 = tpu.matmul %222, %219, %cst_83 {dimension_numbers = #tpu.dot_dimension_numbers<[1], [1], [0], [0], [0, 0, 1, 0], [], []>} : vector<8x128xf32>, vector<8x128xf32>, vector<8x8xf32> -> vector<8x8xf32>
    %cst_84 = arith.constant 0.353553385 : f32
    %224 = vector.broadcast %cst_84 : f32 to vector<8x8xf32>
    %225 = arith.mulf %223, %224 : vector<8x8xf32>
    %226 = arith.addf %225, %20 : vector<8x8xf32>
    %cst_85 = arith.constant dense<0xFF800000> : vector<8xf32>
    %227 = vector.multi_reduction <maximumf>, %226, %cst_85 [1] : vector<8x8xf32> to vector<8xf32>
    %228 = vector.shape_cast %227 : vector<8xf32> to vector<8x1xf32>
    %229 = vector.broadcast %228 : vector<8x1xf32> to vector<8x8xf32>
    %230 = arith.subf %226, %229 : vector<8x8xf32>
    %231 = math.exp %230 : vector<8x8xf32>
    %cst_86 = arith.constant dense<0.000000e+00> : vector<8xf32>
    %232 = vector.multi_reduction <add>, %231, %cst_86 [1] : vector<8x8xf32> to vector<8xf32>
    %233 = vector.shape_cast %232 : vector<8xf32> to vector<8x1xf32>
    %234 = vector.broadcast %233 : vector<8x1xf32> to vector<8x8xf32>
    %235 = arith.divf %231, %234 : vector<8x8xf32>
    %236 = vector.broadcast %28 : vector<1x128xf32> to vector<8x128xf32>
    %237 = arith.mulf %211, %236 : vector<8x128xf32>
    %cst_87 = arith.constant dense<0.000000e+00> : vector<8x128xf32>
    %238 = tpu.matmul %235, %237, %cst_87 {dimension_numbers = #tpu.dot_dimension_numbers<[1], [0], [0], [1], [0, 0, 1, 1], [], []>} : vector<8x8xf32>, vector<8x128xf32>, vector<8x128xf32> -> vector<8x128xf32>
    %239 = arith.addf %220, %238 : vector<8x128xf32>
    %240 = vector.broadcast %35 : vector<1x128xf32> to vector<8x128xf32>
    %241 = arith.mulf %215, %240 : vector<8x128xf32>
    %cst_88 = arith.constant dense<0.000000e+00> : vector<8x8xf32>
    %242 = tpu.matmul %241, %219, %cst_88 {dimension_numbers = #tpu.dot_dimension_numbers<[1], [1], [0], [0], [0, 0, 1, 0], [], []>} : vector<8x128xf32>, vector<8x128xf32>, vector<8x8xf32> -> vector<8x8xf32>
    %cst_89 = arith.constant 0.353553385 : f32
    %243 = vector.broadcast %cst_89 : f32 to vector<8x8xf32>
    %244 = arith.mulf %242, %243 : vector<8x8xf32>
    %245 = arith.addf %244, %20 : vector<8x8xf32>
    %cst_90 = arith.constant dense<0xFF800000> : vector<8xf32>
    %246 = vector.multi_reduction <maximumf>, %245, %cst_90 [1] : vector<8x8xf32> to vector<8xf32>
    %247 = vector.shape_cast %246 : vector<8xf32> to vector<8x1xf32>
    %248 = vector.broadcast %247 : vector<8x1xf32> to vector<8x8xf32>
    %249 = arith.subf %245, %248 : vector<8x8xf32>
    %250 = math.exp %249 : vector<8x8xf32>
    %cst_91 = arith.constant dense<0.000000e+00> : vector<8xf32>
    %251 = vector.multi_reduction <add>, %250, %cst_91 [1] : vector<8x8xf32> to vector<8xf32>
    %252 = vector.shape_cast %251 : vector<8xf32> to vector<8x1xf32>
    %253 = vector.broadcast %252 : vector<8x1xf32> to vector<8x8xf32>
    %254 = arith.divf %250, %253 : vector<8x8xf32>
    %255 = vector.broadcast %35 : vector<1x128xf32> to vector<8x128xf32>
    %256 = arith.mulf %211, %255 : vector<8x128xf32>
    %cst_92 = arith.constant dense<0.000000e+00> : vector<8x128xf32>
    %257 = tpu.matmul %254, %256, %cst_92 {dimension_numbers = #tpu.dot_dimension_numbers<[1], [0], [0], [1], [0, 0, 1, 1], [], []>} : vector<8x8xf32>, vector<8x128xf32>, vector<8x128xf32> -> vector<8x128xf32>
    %258 = arith.addf %239, %257 : vector<8x128xf32>
    %259 = vector.broadcast %42 : vector<1x128xf32> to vector<8x128xf32>
    %260 = arith.mulf %215, %259 : vector<8x128xf32>
    %cst_93 = arith.constant dense<0.000000e+00> : vector<8x8xf32>
    %261 = tpu.matmul %260, %219, %cst_93 {dimension_numbers = #tpu.dot_dimension_numbers<[1], [1], [0], [0], [0, 0, 1, 0], [], []>} : vector<8x128xf32>, vector<8x128xf32>, vector<8x8xf32> -> vector<8x8xf32>
    %cst_94 = arith.constant 0.353553385 : f32
    %262 = vector.broadcast %cst_94 : f32 to vector<8x8xf32>
    %263 = arith.mulf %261, %262 : vector<8x8xf32>
    %264 = arith.addf %263, %20 : vector<8x8xf32>
    %cst_95 = arith.constant dense<0xFF800000> : vector<8xf32>
    %265 = vector.multi_reduction <maximumf>, %264, %cst_95 [1] : vector<8x8xf32> to vector<8xf32>
    %266 = vector.shape_cast %265 : vector<8xf32> to vector<8x1xf32>
    %267 = vector.broadcast %266 : vector<8x1xf32> to vector<8x8xf32>
    %268 = arith.subf %264, %267 : vector<8x8xf32>
    %269 = math.exp %268 : vector<8x8xf32>
    %cst_96 = arith.constant dense<0.000000e+00> : vector<8xf32>
    %270 = vector.multi_reduction <add>, %269, %cst_96 [1] : vector<8x8xf32> to vector<8xf32>
    %271 = vector.shape_cast %270 : vector<8xf32> to vector<8x1xf32>
    %272 = vector.broadcast %271 : vector<8x1xf32> to vector<8x8xf32>
    %273 = arith.divf %269, %272 : vector<8x8xf32>
    %274 = vector.broadcast %42 : vector<1x128xf32> to vector<8x128xf32>
    %275 = arith.mulf %211, %274 : vector<8x128xf32>
    %cst_97 = arith.constant dense<0.000000e+00> : vector<8x128xf32>
    %276 = tpu.matmul %273, %275, %cst_97 {dimension_numbers = #tpu.dot_dimension_numbers<[1], [0], [0], [1], [0, 0, 1, 1], [], []>} : vector<8x8xf32>, vector<8x128xf32>, vector<8x128xf32> -> vector<8x128xf32>
    %277 = arith.addf %258, %276 : vector<8x128xf32>
    %278 = vector.broadcast %49 : vector<1x128xf32> to vector<8x128xf32>
    %279 = arith.mulf %215, %278 : vector<8x128xf32>
    %cst_98 = arith.constant dense<0.000000e+00> : vector<8x8xf32>
    %280 = tpu.matmul %279, %219, %cst_98 {dimension_numbers = #tpu.dot_dimension_numbers<[1], [1], [0], [0], [0, 0, 1, 0], [], []>} : vector<8x128xf32>, vector<8x128xf32>, vector<8x8xf32> -> vector<8x8xf32>
    %cst_99 = arith.constant 0.353553385 : f32
    %281 = vector.broadcast %cst_99 : f32 to vector<8x8xf32>
    %282 = arith.mulf %280, %281 : vector<8x8xf32>
    %283 = arith.addf %282, %20 : vector<8x8xf32>
    %cst_100 = arith.constant dense<0xFF800000> : vector<8xf32>
    %284 = vector.multi_reduction <maximumf>, %283, %cst_100 [1] : vector<8x8xf32> to vector<8xf32>
    %285 = vector.shape_cast %284 : vector<8xf32> to vector<8x1xf32>
    %286 = vector.broadcast %285 : vector<8x1xf32> to vector<8x8xf32>
    %287 = arith.subf %283, %286 : vector<8x8xf32>
    %288 = math.exp %287 : vector<8x8xf32>
    %cst_101 = arith.constant dense<0.000000e+00> : vector<8xf32>
    %289 = vector.multi_reduction <add>, %288, %cst_101 [1] : vector<8x8xf32> to vector<8xf32>
    %290 = vector.shape_cast %289 : vector<8xf32> to vector<8x1xf32>
    %291 = vector.broadcast %290 : vector<8x1xf32> to vector<8x8xf32>
    %292 = arith.divf %288, %291 : vector<8x8xf32>
    %293 = vector.broadcast %49 : vector<1x128xf32> to vector<8x128xf32>
    %294 = arith.mulf %211, %293 : vector<8x128xf32>
    %cst_102 = arith.constant dense<0.000000e+00> : vector<8x128xf32>
    %295 = tpu.matmul %292, %294, %cst_102 {dimension_numbers = #tpu.dot_dimension_numbers<[1], [0], [0], [1], [0, 0, 1, 1], [], []>} : vector<8x8xf32>, vector<8x128xf32>, vector<8x128xf32> -> vector<8x128xf32>
    %296 = arith.addf %277, %295 : vector<8x128xf32>
    %c1_103 = arith.constant 1 : index
    %c0_104 = arith.constant 0 : index
    %c0_105 = arith.constant 0 : index
    %297 = vector.load %arg9[%c1_103, %c0_104, %c0_105] : memref<2x128x32xf32, #tpu.memory_space<vmem>>, vector<1x128x32xf32>
    %298 = vector.shape_cast %297 : vector<1x128x32xf32> to vector<128x32xf32>
    %cst_106 = arith.constant dense<0.000000e+00> : vector<8x32xf32>
    %299 = tpu.matmul %296, %298, %cst_106 {dimension_numbers = #tpu.dot_dimension_numbers<[1], [0], [0], [1], [0, 0, 1, 1], [], []>} : vector<8x128xf32>, vector<128x32xf32>, vector<8x32xf32> -> vector<8x32xf32>
    %300 = arith.addf %191, %299 : vector<8x32xf32>
    %c1_107 = arith.constant 1 : index
    %c0_108 = arith.constant 0 : index
    %c0_109 = arith.constant 0 : index
    %301 = vector.load %arg10[%c1_107, %c0_108, %c0_109] : memref<2x1x32xf32, #tpu.memory_space<vmem>>, vector<1x1x32xf32>
    %302 = vector.shape_cast %301 : vector<1x1x32xf32> to vector<1x32xf32>
    %303 = arith.mulf %300, %300 : vector<8x32xf32>
    %cst_110 = arith.constant dense<0.000000e+00> : vector<8xf32>
    %304 = vector.multi_reduction <add>, %303, %cst_110 [1] : vector<8x32xf32> to vector<8xf32>
    %305 = vector.shape_cast %304 : vector<8xf32> to vector<8x1xf32>
    %cst_111 = arith.constant 3.200000e+01 : f32
    %306 = vector.broadcast %cst_111 : f32 to vector<8x1xf32>
    %307 = arith.divf %305, %306 : vector<8x1xf32>
    %cst_112 = arith.constant 9.99999997E-7 : f32
    %308 = vector.broadcast %cst_112 : f32 to vector<8x1xf32>
    %309 = arith.addf %307, %308 : vector<8x1xf32>
    %310 = math.rsqrt %309 : vector<8x1xf32>
    %311 = vector.broadcast %310 : vector<8x1xf32> to vector<8x32xf32>
    %312 = arith.mulf %300, %311 : vector<8x32xf32>
    %313 = vector.broadcast %302 : vector<1x32xf32> to vector<8x32xf32>
    %314 = arith.mulf %312, %313 : vector<8x32xf32>
    %c1_113 = arith.constant 1 : index
    %c0_114 = arith.constant 0 : index
    %c0_115 = arith.constant 0 : index
    %315 = vector.load %arg11[%c1_113, %c0_114, %c0_115] : memref<2x32x256xf32, #tpu.memory_space<vmem>>, vector<1x32x256xf32>
    %316 = vector.shape_cast %315 : vector<1x32x256xf32> to vector<32x256xf32>
    %cst_116 = arith.constant dense<0.000000e+00> : vector<8x256xf32>
    %317 = tpu.matmul %314, %316, %cst_116 {dimension_numbers = #tpu.dot_dimension_numbers<[1], [0], [0], [1], [0, 0, 1, 1], [], []>} : vector<8x32xf32>, vector<32x256xf32>, vector<8x256xf32> -> vector<8x256xf32>
    %318 = vector.extract_strided_slice %317 {offsets = [0, 0], sizes = [8, 128], strides = [1, 1]} : vector<8x256xf32> to vector<8x128xf32>
    %319 = vector.extract_strided_slice %317 {offsets = [0, 128], sizes = [8, 128], strides = [1, 1]} : vector<8x256xf32> to vector<8x128xf32>
    %320 = arith.negf %318 : vector<8x128xf32>
    %321 = math.exp %320 : vector<8x128xf32>
    %cst_117 = arith.constant 1.000000e+00 : f32
    %322 = vector.broadcast %cst_117 : f32 to vector<8x128xf32>
    %323 = arith.addf %322, %321 : vector<8x128xf32>
    %324 = arith.divf %322, %323 : vector<8x128xf32>
    %325 = arith.mulf %318, %324 : vector<8x128xf32>
    %326 = arith.mulf %325, %319 : vector<8x128xf32>
    %c1_118 = arith.constant 1 : index
    %c0_119 = arith.constant 0 : index
    %c0_120 = arith.constant 0 : index
    %327 = vector.load %arg12[%c1_118, %c0_119, %c0_120] : memref<2x128x32xf32, #tpu.memory_space<vmem>>, vector<1x128x32xf32>
    %328 = vector.shape_cast %327 : vector<1x128x32xf32> to vector<128x32xf32>
    %cst_121 = arith.constant dense<0.000000e+00> : vector<8x32xf32>
    %329 = tpu.matmul %326, %328, %cst_121 {dimension_numbers = #tpu.dot_dimension_numbers<[1], [0], [0], [1], [0, 0, 1, 1], [], []>} : vector<8x128xf32>, vector<128x32xf32>, vector<8x32xf32> -> vector<8x32xf32>
    %330 = arith.addf %300, %329 : vector<8x32xf32>
    %c0_122 = arith.constant 0 : index
    %c0_123 = arith.constant 0 : index
    %331 = vector.load %arg13[%c0_122, %c0_123] : memref<1x32xf32, #tpu.memory_space<vmem>>, vector<1x32xf32>
    %332 = arith.mulf %330, %330 : vector<8x32xf32>
    %cst_124 = arith.constant dense<0.000000e+00> : vector<8xf32>
    %333 = vector.multi_reduction <add>, %332, %cst_124 [1] : vector<8x32xf32> to vector<8xf32>
    %334 = vector.shape_cast %333 : vector<8xf32> to vector<8x1xf32>
    %cst_125 = arith.constant 3.200000e+01 : f32
    %335 = vector.broadcast %cst_125 : f32 to vector<8x1xf32>
    %336 = arith.divf %334, %335 : vector<8x1xf32>
    %cst_126 = arith.constant 9.99999997E-7 : f32
    %337 = vector.broadcast %cst_126 : f32 to vector<8x1xf32>
    %338 = arith.addf %336, %337 : vector<8x1xf32>
    %339 = math.rsqrt %338 : vector<8x1xf32>
    %340 = vector.broadcast %339 : vector<8x1xf32> to vector<8x32xf32>
    %341 = arith.mulf %330, %340 : vector<8x32xf32>
    %342 = vector.broadcast %331 : vector<1x32xf32> to vector<8x32xf32>
    %343 = arith.mulf %341, %342 : vector<8x32xf32>
    %c0_127 = arith.constant 0 : index
    %c0_128 = arith.constant 0 : index
    %344 = vector.load %arg14[%c0_127, %c0_128] : memref<32x128xf32, #tpu.memory_space<vmem>>, vector<32x128xf32>
    %cst_129 = arith.constant dense<0.000000e+00> : vector<8x128xf32>
    %345 = tpu.matmul %343, %344, %cst_129 {dimension_numbers = #tpu.dot_dimension_numbers<[1], [0], [0], [1], [0, 0, 1, 1], [], []>} : vector<8x32xf32>, vector<32x128xf32>, vector<8x128xf32> -> vector<8x128xf32>
    %c0_130 = arith.constant 0 : index
    %c0_131 = arith.constant 0 : index
    %346 = vector.load %arg15[%c0_130, %c0_131] : memref<1x128xf32, #tpu.memory_space<vmem>>, vector<1x128xf32>
    %347 = vector.broadcast %346 : vector<1x128xf32> to vector<8x128xf32>
    %348 = arith.addf %345, %347 : vector<8x128xf32>
    %c0_132 = arith.constant 0 : index
    %c0_133 = arith.constant 0 : index
    %c0_134 = arith.constant 0 : index
    %349 = vector.load %arg16[%c0_132, %c0_133, %c0_134] : memref<1x8x128xf32, #tpu.memory_space<vmem>>, vector<1x8x128xf32>
    %350 = vector.shape_cast %349 : vector<1x8x128xf32> to vector<8x128xf32>
    %351 = vector.shape_cast %348 : vector<8x128xf32> to vector<1x8x128xf32>
    tpu.vector_store %arg16[%c0_132, %c0_133, %c0_134], %351 {strides = array<i32>} : memref<1x8x128xf32, #tpu.memory_space<vmem>>, vector<1x8x128xf32>,
    return
  }
  func.func @transform_0(%arg0: i32) -> (i32, i32, i32) {
    %c0_i32 = arith.constant 0 : i32
    %c0_i32_0 = arith.constant 0 : i32
    %c0_i32_1 = arith.constant 0 : i32
    return %arg0, %c0_i32, %c0_i32_0 : i32, i32, i32
  }
  func.func @transform_1(%arg0: i32) -> (i32, i32, i32) {
    %c0_i32 = arith.constant 0 : i32
    %c0_i32_0 = arith.constant 0 : i32
    %c0_i32_1 = arith.constant 0 : i32
    return %arg0, %c0_i32, %c0_i32_0 : i32, i32, i32
  }
  func.func @transform_2(%arg0: i32) -> (i32, i32) {
    %c0_i32 = arith.constant 0 : i32
    %c0_i32_0 = arith.constant 0 : i32
    %c0_i32_1 = arith.constant 0 : i32
    return %c0_i32, %c0_i32_0 : i32, i32
  }
  func.func @transform_3(%arg0: i32) -> (i32, i32) {
    %c0_i32 = arith.constant 0 : i32
    %c0_i32_0 = arith.constant 0 : i32
    %c0_i32_1 = arith.constant 0 : i32
    return %c0_i32, %c0_i32_0 : i32, i32
  }
  func.func @transform_4(%arg0: i32) -> (i32, i32) {
    %c0_i32 = arith.constant 0 : i32
    %c0_i32_0 = arith.constant 0 : i32
    %c0_i32_1 = arith.constant 0 : i32
    return %c0_i32, %c0_i32_0 : i32, i32
  }
  func.func @transform_5(%arg0: i32) -> (i32, i32) {
    %c0_i32 = arith.constant 0 : i32
    %c0_i32_0 = arith.constant 0 : i32
    %c0_i32_1 = arith.constant 0 : i32
    return %c0_i32, %c0_i32_0 : i32, i32
  }
  func.func @transform_6(%arg0: i32) -> (i32, i32, i32) {
    %c0_i32 = arith.constant 0 : i32
    %c0_i32_0 = arith.constant 0 : i32
    %c0_i32_1 = arith.constant 0 : i32
    %c0_i32_2 = arith.constant 0 : i32
    return %c0_i32, %c0_i32_0, %c0_i32_1 : i32, i32, i32
  }
  func.func @transform_7(%arg0: i32) -> (i32, i32, i32) {
    %c0_i32 = arith.constant 0 : i32
    %c0_i32_0 = arith.constant 0 : i32
    %c0_i32_1 = arith.constant 0 : i32
    %c0_i32_2 = arith.constant 0 : i32
    return %c0_i32, %c0_i32_0, %c0_i32_1 : i32, i32, i32
  }
  func.func @transform_8(%arg0: i32) -> (i32, i32, i32) {
    %c0_i32 = arith.constant 0 : i32
    %c0_i32_0 = arith.constant 0 : i32
    %c0_i32_1 = arith.constant 0 : i32
    %c0_i32_2 = arith.constant 0 : i32
    return %c0_i32, %c0_i32_0, %c0_i32_1 : i32, i32, i32
  }
  func.func @transform_9(%arg0: i32) -> (i32, i32, i32) {
    %c0_i32 = arith.constant 0 : i32
    %c0_i32_0 = arith.constant 0 : i32
    %c0_i32_1 = arith.constant 0 : i32
    %c0_i32_2 = arith.constant 0 : i32
    return %c0_i32, %c0_i32_0, %c0_i32_1 : i32, i32, i32
  }
  func.func @transform_10(%arg0: i32) -> (i32, i32, i32) {
    %c0_i32 = arith.constant 0 : i32
    %c0_i32_0 = arith.constant 0 : i32
    %c0_i32_1 = arith.constant 0 : i32
    %c0_i32_2 = arith.constant 0 : i32
    return %c0_i32, %c0_i32_0, %c0_i32_1 : i32, i32, i32
  }
  func.func @transform_11(%arg0: i32) -> (i32, i32, i32) {
    %c0_i32 = arith.constant 0 : i32
    %c0_i32_0 = arith.constant 0 : i32
    %c0_i32_1 = arith.constant 0 : i32
    %c0_i32_2 = arith.constant 0 : i32
    return %c0_i32, %c0_i32_0, %c0_i32_1 : i32, i32, i32
  }
  func.func @transform_12(%arg0: i32) -> (i32, i32) {
    %c0_i32 = arith.constant 0 : i32
    %c0_i32_0 = arith.constant 0 : i32
    %c0_i32_1 = arith.constant 0 : i32
    return %c0_i32, %c0_i32_0 : i32, i32
  }
  func.func @transform_13(%arg0: i32) -> (i32, i32) {
    %c0_i32 = arith.constant 0 : i32
    %c0_i32_0 = arith.constant 0 : i32
    %c0_i32_1 = arith.constant 0 : i32
    return %c0_i32, %c0_i32_0 : i32, i32
  }
  func.func @transform_14(%arg0: i32) -> (i32, i32) {
    %c0_i32 = arith.constant 0 : i32
    %c0_i32_0 = arith.constant 0 : i32
    %c0_i32_1 = arith.constant 0 : i32
    return %c0_i32, %c0_i32_0 : i32, i32
  }
  func.func @transform_15(%arg0: i32) -> (i32, i32, i32) {
    %c0_i32 = arith.constant 0 : i32
    %c0_i32_0 = arith.constant 0 : i32
    %c0_i32_1 = arith.constant 0 : i32
    return %arg0, %c0_i32, %c0_i32_0 : i32, i32, i32
  }
}

</mosaic_0001>

<llo_original>
// kernel: forward.1
$region0: #{forward.1}
  #allocation0 [shape = 'u32[]', space=smem, size = 0x4, offset = 0x4, fixed_abs, tag = 'smem constant byte address 0x4 - core index']
  #allocation1 [shape = 'u32[72,128]{1,0:T(1,128)}', space=vmem, size = 0x9000, scoped, tag = 'internal scratch']
  %s0 = inlined_call_operand.vmem [shape: s32[2,8,1], index: 0, kind: input, shape index: {}]
  %s1 = inlined_call_operand.vmem [shape: f32[2,1,8], index: 1, kind: input, shape index: {}]
  %s2 = inlined_call_operand.vmem [shape: f32[8,128], index: 2, kind: input, shape index: {}]
  %s3 = inlined_call_operand.vmem [shape: f32[8,128], index: 3, kind: input, shape index: {}]
  %s4 = inlined_call_operand.vmem [shape: f32[128,128], index: 4, kind: input, shape index: {}]
  %s5 = inlined_call_operand.vmem [shape: f32[64,32], index: 5, kind: input, shape index: {}]
  %s6 = inlined_call_operand.vmem [shape: f32[2,1,32], index: 6, kind: input, shape index: {}]
  %s7 = inlined_call_operand.vmem [shape: f32[2,32,384], index: 7, kind: input, shape index: {}]
  %s8 = inlined_call_operand.vmem [shape: f32[2,128,32], index: 8, kind: input, shape index: {}]
  %s9 = inlined_call_operand.vmem [shape: f32[2,1,32], index: 9, kind: input, shape index: {}]
  %s10 = inlined_call_operand.vmem [shape: f32[2,32,256], index: 10, kind: input, shape index: {}]
  %s11 = inlined_call_operand.vmem [shape: f32[2,128,32], index: 11, kind: input, shape index: {}]
  %s12 = inlined_call_operand.vmem [shape: f32[1,32], index: 12, kind: input, shape index: {}]
  %s13 = inlined_call_operand.vmem [shape: f32[32,128], index: 13, kind: input, shape index: {}]
  %s14 = inlined_call_operand.vmem [shape: f32[1,128], index: 14, kind: input, shape index: {}]
  %s15 = inlined_call_operand.vmem [shape: f32[2,8,128], index: 15, kind: output, shape index: {}]
  %s16 = sld [smem:[#allocation0]]
  $region93: #{forward.1} parent=0
    _
  %s18 = ssub.s32 1, %s16
  %s19 = scalar_select 0, %s18, %s16
  loop: start=0, step=1, limit=4
  $region2: #{forward.1} parent=0 // loop_pre_header
    _
  $region3: #{forward.1} parent=0 // loop_header
    %s21 = sphi 0, %s25
    %p22 = scmp.ge.s32.totalorder %s21, 4
    %s31 = sphi 0, %s33
    %s34 = sphi 0, %s31
    %s35 = sphi 0, %s34
    %s51 = sphi 0, %s35
    %s57 = sphi 0, %s59
    %s60 = sphi 0, %s57
    %s61 = sphi 0, %s60
    %s77 = sphi 0, %s61
    %s81 = sphi 0, %s81
    %s83 = sphi 0, %s81
    %s84 = sphi 0, %s83
    %s98 = sphi 0, %s84
    %s102 = sphi 0, %s102
    %s104 = sphi 0, %s102
    %s105 = sphi 0, %s104
    %s119 = sphi 0, %s105
    %s123 = sphi 0, %s123
    %s125 = sphi 0, %s123
    %s126 = sphi 0, %s125
    %s140 = sphi 0, %s126
    %s144 = sphi 0, %s144
    %s146 = sphi 0, %s144
    %s147 = sphi 0, %s146
    %s161 = sphi 0, %s147
    %s165 = sphi 0, %s165
    %s167 = sphi 0, %s165
    %s168 = sphi 0, %s167
    %s182 = sphi 0, %s168
    %s186 = sphi 0, %s186
    %s188 = sphi 0, %s186
    %s189 = sphi 0, %s188
    %s203 = sphi 0, %s189
    %s207 = sphi 0, %s207
    %s209 = sphi 0, %s207
    %s210 = sphi 0, %s209
    %s224 = sphi 0, %s210
    %s228 = sphi 0, %s228
    %s230 = sphi 0, %s228
    %s231 = sphi 0, %s230
    %s245 = sphi 0, %s231
    %s249 = sphi 0, %s249
    %s251 = sphi 0, %s249
    %s252 = sphi 0, %s251
    %s266 = sphi 0, %s252
    %s270 = sphi 0, %s270
    %s272 = sphi 0, %s270
    %s273 = sphi 0, %s272
    %s287 = sphi 0, %s273
    %s291 = sphi 0, %s291
    %s293 = sphi 0, %s291
    %s294 = sphi 0, %s293
    %s308 = sphi 0, %s294
    %s312 = sphi 0, %s312
    %s314 = sphi 0, %s312
    %s315 = sphi 0, %s314
    %s329 = sphi 0, %s315
    %s333 = sphi 0, %s333
    %s335 = sphi 0, %s333
    %s336 = sphi 0, %s335
    %s350 = sphi 0, %s336
    %s356 = sphi 0, %s358
    %s359 = sphi 0, %s356
    %s360 = sphi 0, %s359
    %s376 = sphi 0, %s360
  $region4: #{forward.1} parent=0 // loop_header_branch
    %24 = sbr.rel (%p22) target = $region8
  $region5: #{forward.1} parent=0 // loop_body
    %s26 = ssub.s32 %s21, 1
    %s27 = ssub.s32 %s21, 2
    %s28 = sadd.s32 %s21, 1
    %s29 = ssub.s32 %s21, %s28
    %p30 = scmp.eq.s32.totalorder %s29, 0
    %s32 = sadd.s32 %s31, 1
    %s33 = scalar_select %p30, %s31, %s32
    %p36 = pneg %p30
    %p37 = scmp.eq.s32.totalorder %s21, 1
    %p38 = por %p36, %p37
    %p39 = scmp.ne.s32.totalorder %s31, %s34
    %p40 = scmp.eq.s32.totalorder %s21, 0
    %p41 = por %p39, %p40
    %p42 = scmp.ne.s32.totalorder %s31, %s34
    %p43 = scmp.eq.s32.totalorder %s26, 1
    %p44 = por %p42, %p43
    %p45 = scmp.ne.s32.totalorder %s34, %s35
    %p46 = scmp.eq.s32.totalorder %s26, 0
    %p47 = por %p45, %p46
    %p48 = scmp.ne.s32.totalorder %s34, %s35
    %p49 = scmp.eq.s32.totalorder %s27, 1
    %p50 = por %p48, %p49
    %p52 = scmp.ne.s32.totalorder %s35, %s51
    %p53 = scmp.eq.s32.totalorder %s27, 0
    %p54 = por %p52, %p53
    %s55 = ssub.s32 %s21, %s28
    %p56 = scmp.eq.s32.totalorder %s55, 0
    %s58 = sadd.s32 %s57, 1
    %s59 = scalar_select %p56, %s57, %s58
    %p62 = pneg %p56
    %p63 = scmp.eq.s32.totalorder %s21, 1
    %p64 = por %p62, %p63
    %p65 = scmp.ne.s32.totalorder %s57, %s60
    %p66 = scmp.eq.s32.totalorder %s21, 0
    %p67 = por %p65, %p66
    %p68 = scmp.ne.s32.totalorder %s57, %s60
    %p69 = scmp.eq.s32.totalorder %s26, 1
    %p70 = por %p68, %p69
    %p71 = scmp.ne.s32.totalorder %s60, %s61
    %p72 = scmp.eq.s32.totalorder %s26, 0
    %p73 = por %p71, %p72
    %p74 = scmp.ne.s32.totalorder %s60, %s61
    %p75 = scmp.eq.s32.totalorder %s27, 1
    %p76 = por %p74, %p75
    %p78 = scmp.ne.s32.totalorder %s61, %s77
    %p79 = scmp.eq.s32.totalorder %s27, 0
    %p80 = por %p78, %p79
    %s82 = sadd.s32 %s81, 1
    %p85 = scmp.eq.s32.totalorder %s21, 1
    %p86 = scmp.ne.s32.totalorder %s81, %s83
    %p87 = scmp.eq.s32.totalorder %s21, 0
    %p88 = por %p86, %p87
    %p89 = scmp.ne.s32.totalorder %s81, %s83
    %p90 = scmp.eq.s32.totalorder %s26, 1
    %p91 = por %p89, %p90
    %p92 = scmp.ne.s32.totalorder %s83, %s84
    %p93 = scmp.eq.s32.totalorder %s26, 0
    %p94 = por %p92, %p93
    %p95 = scmp.ne.s32.totalorder %s83, %s84
    %p96 = scmp.eq.s32.totalorder %s27, 1
    %p97 = por %p95, %p96
    %p99 = scmp.ne.s32.totalorder %s84, %s98
    %p100 = scmp.eq.s32.totalorder %s27, 0
    %p101 = por %p99, %p100
    %s103 = sadd.s32 %s102, 1
    %p106 = scmp.eq.s32.totalorder %s21, 1
    %p107 = scmp.ne.s32.totalorder %s102, %s104
    %p108 = scmp.eq.s32.totalorder %s21, 0
    %p109 = por %p107, %p108
    %p110 = scmp.ne.s32.totalorder %s102, %s104
    %p111 = scmp.eq.s32.totalorder %s26, 1
    %p112 = por %p110, %p111
    %p113 = scmp.ne.s32.totalorder %s104, %s105
    %p114 = scmp.eq.s32.totalorder %s26, 0
    %p115 = por %p113, %p114
    %p116 = scmp.ne.s32.totalorder %s104, %s105
    %p117 = scmp.eq.s32.totalorder %s27, 1
    %p118 = por %p116, %p117
    %p120 = scmp.ne.s32.totalorder %s105, %s119
    %p121 = scmp.eq.s32.totalorder %s27, 0
    %p122 = por %p120, %p121
    %s124 = sadd.s32 %s123, 1
    %p127 = scmp.eq.s32.totalorder %s21, 1
    %p128 = scmp.ne.s32.totalorder %s123, %s125
    %p129 = scmp.eq.s32.totalorder %s21, 0
    %p130 = por %p128, %p129
    %p131 = scmp.ne.s32.totalorder %s123, %s125
    %p132 = scmp.eq.s32.totalorder %s26, 1
    %p133 = por %p131, %p132
    %p134 = scmp.ne.s32.totalorder %s125, %s126
    %p135 = scmp.eq.s32.totalorder %s26, 0
    %p136 = por %p134, %p135
    %p137 = scmp.ne.s32.totalorder %s125, %s126
    %p138 = scmp.eq.s32.totalorder %s27, 1
    %p139 = por %p137, %p138
    %p141 = scmp.ne.s32.totalorder %s126, %s140
    %p142 = scmp.eq.s32.totalorder %s27, 0
    %p143 = por %p141, %p142
    %s145 = sadd.s32 %s144, 1
    %p148 = scmp.eq.s32.totalorder %s21, 1
    %p149 = scmp.ne.s32.totalorder %s144, %s146
    %p150 = scmp.eq.s32.totalorder %s21, 0
    %p151 = por %p149, %p150
    %p152 = scmp.ne.s32.totalorder %s144, %s146
    %p153 = scmp.eq.s32.totalorder %s26, 1
    %p154 = por %p152, %p153
    %p155 = scmp.ne.s32.totalorder %s146, %s147
    %p156 = scmp.eq.s32.totalorder %s26, 0
    %p157 = por %p155, %p156
    %p158 = scmp.ne.s32.totalorder %s146, %s147
    %p159 = scmp.eq.s32.totalorder %s27, 1
    %p160 = por %p158, %p159
    %p162 = scmp.ne.s32.totalorder %s147, %s161
    %p163 = scmp.eq.s32.totalorder %s27, 0
    %p164 = por %p162, %p163
    %s166 = sadd.s32 %s165, 1
    %p169 = scmp.eq.s32.totalorder %s21, 1
    %p170 = scmp.ne.s32.totalorder %s165, %s167
    %p171 = scmp.eq.s32.totalorder %s21, 0
    %p172 = por %p170, %p171
    %p173 = scmp.ne.s32.totalorder %s165, %s167
    %p174 = scmp.eq.s32.totalorder %s26, 1
    %p175 = por %p173, %p174
    %p176 = scmp.ne.s32.totalorder %s167, %s168
    %p177 = scmp.eq.s32.totalorder %s26, 0
    %p178 = por %p176, %p177
    %p179 = scmp.ne.s32.totalorder %s167, %s168
    %p180 = scmp.eq.s32.totalorder %s27, 1
    %p181 = por %p179, %p180
    %p183 = scmp.ne.s32.totalorder %s168, %s182
    %p184 = scmp.eq.s32.totalorder %s27, 0
    %p185 = por %p183, %p184
    %s187 = sadd.s32 %s186, 1
    %p190 = scmp.eq.s32.totalorder %s21, 1
    %p191 = scmp.ne.s32.totalorder %s186, %s188
    %p192 = scmp.eq.s32.totalorder %s21, 0
    %p193 = por %p191, %p192
    %p194 = scmp.ne.s32.totalorder %s186, %s188
    %p195 = scmp.eq.s32.totalorder %s26, 1
    %p196 = por %p194, %p195
    %p197 = scmp.ne.s32.totalorder %s188, %s189
    %p198 = scmp.eq.s32.totalorder %s26, 0
    %p199 = por %p197, %p198
    %p200 = scmp.ne.s32.totalorder %s188, %s189
    %p201 = scmp.eq.s32.totalorder %s27, 1
    %p202 = por %p200, %p201
    %p204 = scmp.ne.s32.totalorder %s189, %s203
    %p205 = scmp.eq.s32.totalorder %s27, 0
    %p206 = por %p204, %p205
    %s208 = sadd.s32 %s207, 1
    %p211 = scmp.eq.s32.totalorder %s21, 1
    %p212 = scmp.ne.s32.totalorder %s207, %s209
    %p213 = scmp.eq.s32.totalorder %s21, 0
    %p214 = por %p212, %p213
    %p215 = scmp.ne.s32.totalorder %s207, %s209
    %p216 = scmp.eq.s32.totalorder %s26, 1
    %p217 = por %p215, %p216
    %p218 = scmp.ne.s32.totalorder %s209, %s210
    %p219 = scmp.eq.s32.totalorder %s26, 0
    %p220 = por %p218, %p219
    %p221 = scmp.ne.s32.totalorder %s209, %s210
    %p222 = scmp.eq.s32.totalorder %s27, 1
    %p223 = por %p221, %p222
    %p225 = scmp.ne.s32.totalorder %s210, %s224
    %p226 = scmp.eq.s32.totalorder %s27, 0
    %p227 = por %p225, %p226
    %s229 = sadd.s32 %s228, 1
    %p232 = scmp.eq.s32.totalorder %s21, 1
    %p233 = scmp.ne.s32.totalorder %s228, %s230
    %p234 = scmp.eq.s32.totalorder %s21, 0
    %p235 = por %p233, %p234
    %p236 = scmp.ne.s32.totalorder %s228, %s230
    %p237 = scmp.eq.s32.totalorder %s26, 1
    %p238 = por %p236, %p237
    %p239 = scmp.ne.s32.totalorder %s230, %s231
    %p240 = scmp.eq.s32.totalorder %s26, 0
    %p241 = por %p239, %p240
    %p242 = scmp.ne.s32.totalorder %s230, %s231
    %p243 = scmp.eq.s32.totalorder %s27, 1
    %p244 = por %p242, %p243
    %p246 = scmp.ne.s32.totalorder %s231, %s245
    %p247 = scmp.eq.s32.totalorder %s27, 0
    %p248 = por %p246, %p247
    %s250 = sadd.s32 %s249, 1
    %p253 = scmp.eq.s32.totalorder %s21, 1
    %p254 = scmp.ne.s32.totalorder %s249, %s251
    %p255 = scmp.eq.s32.totalorder %s21, 0
    %p256 = por %p254, %p255
    %p257 = scmp.ne.s32.totalorder %s249, %s251
    %p258 = scmp.eq.s32.totalorder %s26, 1
    %p259 = por %p257, %p258
    %p260 = scmp.ne.s32.totalorder %s251, %s252
    %p261 = scmp.eq.s32.totalorder %s26, 0
    %p262 = por %p260, %p261
    %p263 = scmp.ne.s32.totalorder %s251, %s252
    %p264 = scmp.eq.s32.totalorder %s27, 1
    %p265 = por %p263, %p264
    %p267 = scmp.ne.s32.totalorder %s252, %s266
    %p268 = scmp.eq.s32.totalorder %s27, 0
    %p269 = por %p267, %p268
    %s271 = sadd.s32 %s270, 1
    %p274 = scmp.eq.s32.totalorder %s21, 1
    %p275 = scmp.ne.s32.totalorder %s270, %s272
    %p276 = scmp.eq.s32.totalorder %s21, 0
    %p277 = por %p275, %p276
    %p278 = scmp.ne.s32.totalorder %s270, %s272
    %p279 = scmp.eq.s32.totalorder %s26, 1
    %p280 = por %p278, %p279
    %p281 = scmp.ne.s32.totalorder %s272, %s273
    %p282 = scmp.eq.s32.totalorder %s26, 0
    %p283 = por %p281, %p282
    %p284 = scmp.ne.s32.totalorder %s272, %s273
    %p285 = scmp.eq.s32.totalorder %s27, 1
    %p286 = por %p284, %p285
    %p288 = scmp.ne.s32.totalorder %s273, %s287
    %p289 = scmp.eq.s32.totalorder %s27, 0
    %p290 = por %p288, %p289
    %s292 = sadd.s32 %s291, 1
    %p295 = scmp.eq.s32.totalorder %s21, 1
    %p296 = scmp.ne.s32.totalorder %s291, %s293
    %p297 = scmp.eq.s32.totalorder %s21, 0
    %p298 = por %p296, %p297
    %p299 = scmp.ne.s32.totalorder %s291, %s293
    %p300 = scmp.eq.s32.totalorder %s26, 1
    %p301 = por %p299, %p300
    %p302 = scmp.ne.s32.totalorder %s293, %s294
    %p303 = scmp.eq.s32.totalorder %s26, 0
    %p304 = por %p302, %p303
    %p305 = scmp.ne.s32.totalorder %s293, %s294
    %p306 = scmp.eq.s32.totalorder %s27, 1
    %p307 = por %p305, %p306
    %p309 = scmp.ne.s32.totalorder %s294, %s308
    %p310 = scmp.eq.s32.totalorder %s27, 0
    %p311 = por %p309, %p310
    %s313 = sadd.s32 %s312, 1
    %p316 = scmp.eq.s32.totalorder %s21, 1
    %p317 = scmp.ne.s32.totalorder %s312, %s314
    %p318 = scmp.eq.s32.totalorder %s21, 0
    %p319 = por %p317, %p318
    %p320 = scmp.ne.s32.totalorder %s312, %s314
    %p321 = scmp.eq.s32.totalorder %s26, 1
    %p322 = por %p320, %p321
    %p323 = scmp.ne.s32.totalorder %s314, %s315
    %p324 = scmp.eq.s32.totalorder %s26, 0
    %p325 = por %p323, %p324
    %p326 = scmp.ne.s32.totalorder %s314, %s315
    %p327 = scmp.eq.s32.totalorder %s27, 1
    %p328 = por %p326, %p327
    %p330 = scmp.ne.s32.totalorder %s315, %s329
    %p331 = scmp.eq.s32.totalorder %s27, 0
    %p332 = por %p330, %p331
    %s334 = sadd.s32 %s333, 1
    %p337 = scmp.eq.s32.totalorder %s21, 1
    %p338 = scmp.ne.s32.totalorder %s333, %s335
    %p339 = scmp.eq.s32.totalorder %s21, 0
    %p340 = por %p338, %p339
    %p341 = scmp.ne.s32.totalorder %s333, %s335
    %p342 = scmp.eq.s32.totalorder %s26, 1
    %p343 = por %p341, %p342
    %p344 = scmp.ne.s32.totalorder %s335, %s336
    %p345 = scmp.eq.s32.totalorder %s26, 0
    %p346 = por %p344, %p345
    %p347 = scmp.ne.s32.totalorder %s335, %s336
    %p348 = scmp.eq.s32.totalorder %s27, 1
    %p349 = por %p347, %p348
    %p351 = scmp.ne.s32.totalorder %s336, %s350
    %p352 = scmp.eq.s32.totalorder %s27, 0
    %p353 = por %p351, %p352
    %s354 = ssub.s32 %s21, %s28
    %p355 = scmp.eq.s32.totalorder %s354, 0
    %s357 = sadd.s32 %s356, 1
    %s358 = scalar_select %p355, %s356, %s357
    %p361 = pneg %p355
    %p362 = scmp.eq.s32.totalorder %s21, 1
    %p363 = por %p361, %p362
    %p364 = scmp.ne.s32.totalorder %s356, %s359
    %p365 = scmp.eq.s32.totalorder %s21, 0
    %p366 = por %p364, %p365
    %p367 = scmp.ne.s32.totalorder %s356, %s359
    %p368 = scmp.eq.s32.totalorder %s26, 1
    %p369 = por %p367, %p368
    %p370 = scmp.ne.s32.totalorder %s359, %s360
    %p371 = scmp.eq.s32.totalorder %s26, 0
    %p372 = por %p370, %p371
    %p373 = scmp.ne.s32.totalorder %s359, %s360
    %p374 = scmp.eq.s32.totalorder %s27, 1
    %p375 = por %p373, %p374
    %p377 = scmp.ne.s32.totalorder %s360, %s376
    %p378 = scmp.eq.s32.totalorder %s27, 0
    %p379 = por %p377, %p378
    %p380 = scmp.le.s32.totalorder 1, %s21
    %p381 = scmp.lt.s32.totalorder %s21, 3
    %p382 = pnand %p380, %p381
    %p383 = pneg %p382
    // Predicated region
    $region9: #{forward.1} parent=5 // pred_check
      _
    $region10: #{forward.1} parent=5 // pred_check_branch
      %385 = sbr.rel (%p382) target = $region12
    $region11: #{forward.1} parent=5 // pred_region
      %s386 = ssub.s32 %s21, 1
      // Predicated region
      $region13: #{forward.1} parent=11 // pred_check
        %p387 = pneg %p94
      $region14: #{forward.1} parent=11 // pred_check_branch
        %389 = sbr.rel (%p387) target = $region16
      $region15: #{forward.1} parent=11 // pred_region
        _
      $region16: #{forward.1} parent=11 // pred_fallthru
        _
      // Predicated region
      $region17: #{forward.1} parent=11 // pred_check
        %p390 = pneg %p115
      $region18: #{forward.1} parent=11 // pred_check_branch
        %392 = sbr.rel (%p390) target = $region20
      $region19: #{forward.1} parent=11 // pred_region
        _
      $region20: #{forward.1} parent=11 // pred_fallthru
        _
      // Predicated region
      $region21: #{forward.1} parent=11 // pred_check
        %p393 = pneg %p136
      $region22: #{forward.1} parent=11 // pred_check_branch
        %395 = sbr.rel (%p393) target = $region24
      $region23: #{forward.1} parent=11 // pred_region
        _
      $region24: #{forward.1} parent=11 // pred_fallthru
        _
      // Predicated region
      $region25: #{forward.1} parent=11 // pred_check
        %p396 = pneg %p157
      $region26: #{forward.1} parent=11 // pred_check_branch
        %398 = sbr.rel (%p396) target = $region28
      $region27: #{forward.1} parent=11 // pred_region
        _
      $region28: #{forward.1} parent=11 // pred_fallthru
        _
      // Predicated region
      $region29: #{forward.1} parent=11 // pred_check
        %p399 = pneg %p178
      $region30: #{forward.1} parent=11 // pred_check_branch
        %401 = sbr.rel (%p399) target = $region32
      $region31: #{forward.1} parent=11 // pred_region
        _
      $region32: #{forward.1} parent=11 // pred_fallthru
        _
      // Predicated region
      $region33: #{forward.1} parent=11 // pred_check
        %p402 = pneg %p199
      $region34: #{forward.1} parent=11 // pred_check_branch
        %404 = sbr.rel (%p402) target = $region36
      $region35: #{forward.1} parent=11 // pred_region
        _
      $region36: #{forward.1} parent=11 // pred_fallthru
        _
      // Predicated region
      $region37: #{forward.1} parent=11 // pred_check
        %p405 = pneg %p220
      $region38: #{forward.1} parent=11 // pred_check_branch
        %407 = sbr.rel (%p405) target = $region40
      $region39: #{forward.1} parent=11 // pred_region
        _
      $region40: #{forward.1} parent=11 // pred_fallthru
        _
      // Predicated region
      $region41: #{forward.1} parent=11 // pred_check
        %p408 = pneg %p241
      $region42: #{forward.1} parent=11 // pred_check_branch
        %410 = sbr.rel (%p408) target = $region44
      $region43: #{forward.1} parent=11 // pred_region
        _
      $region44: #{forward.1} parent=11 // pred_fallthru
        _
      // Predicated region
      $region45: #{forward.1} parent=11 // pred_check
        %p411 = pneg %p262
      $region46: #{forward.1} parent=11 // pred_check_branch
        %413 = sbr.rel (%p411) target = $region48
      $region47: #{forward.1} parent=11 // pred_region
        _
      $region48: #{forward.1} parent=11 // pred_fallthru
        _
      // Predicated region
      $region49: #{forward.1} parent=11 // pred_check
        %p414 = pneg %p283
      $region50: #{forward.1} parent=11 // pred_check_branch
        %416 = sbr.rel (%p414) target = $region52
      $region51: #{forward.1} parent=11 // pred_region
        _
      $region52: #{forward.1} parent=11 // pred_fallthru
        _
      // Predicated region
      $region53: #{forward.1} parent=11 // pred_check
        %p417 = pneg %p304
      $region54: #{forward.1} parent=11 // pred_check_branch
        %419 = sbr.rel (%p417) target = $region56
      $region55: #{forward.1} parent=11 // pred_region
        _
      $region56: #{forward.1} parent=11 // pred_fallthru
        _
      // Predicated region
      $region57: #{forward.1} parent=11 // pred_check
        %p420 = pneg %p325
      $region58: #{forward.1} parent=11 // pred_check_branch
        %422 = sbr.rel (%p420) target = $region60
      $region59: #{forward.1} parent=11 // pred_region
        _
      $region60: #{forward.1} parent=11 // pred_fallthru
        _
      // Predicated region
      $region61: #{forward.1} parent=11 // pred_check
        %p423 = pneg %p346
      $region62: #{forward.1} parent=11 // pred_check_branch
        %425 = sbr.rel (%p423) target = $region64
      $region63: #{forward.1} parent=11 // pred_region
        _
      $region64: #{forward.1} parent=11 // pred_fallthru
        _
    $region12: #{forward.1} parent=5 // pred_fallthru
      _
    %p426 = scmp.lt.s32.totalorder %s21, 2
    // Predicated region
    $region65: #{forward.1} parent=5 // pred_check
      %p427 = pneg %p426
    $region66: #{forward.1} parent=5 // pred_check_branch
      %429 = sbr.rel (%p427) target = $region68
    $region67: #{forward.1} parent=5 // pred_region
      // Predicated region
      $region69: #{forward.1} parent=67 // pred_check
        %p430 = pneg %p41
      $region70: #{forward.1} parent=67 // pred_check_branch
        %432 = sbr.rel (%p430) target = $region72
      $region71: #{forward.1} parent=67 // pred_region
        %p433 = scmp.lt.s32.totalorder %s21, 1
        %s434 = scalar_select %p433, %s21, 1
        %s435 = smul.addr %s434, 8
        %s436 = scalar_lea.vmem %s0, %s435
      $region72: #{forward.1} parent=67 // pred_fallthru
        _
      // Predicated region
      $region73: #{forward.1} parent=67 // pred_check
        %p437 = pneg %p67
      $region74: #{forward.1} parent=67 // pred_check_branch
        %439 = sbr.rel (%p437) target = $region76
      $region75: #{forward.1} parent=67 // pred_region
        %p440 = scmp.lt.s32.totalorder %s21, 1
        %s441 = scalar_select %p440, %s21, 1
        %s442 = scalar_lea.vmem %s1, %s441
      $region76: #{forward.1} parent=67 // pred_fallthru
        _
    $region68: #{forward.1} parent=5 // pred_fallthru
      _
    %p443 = scmp.le.s32.totalorder 1, %s21
    %p444 = scmp.lt.s32.totalorder %s21, 3
    %p445 = pnand %p443, %p444
    %p446 = pneg %p445
    // Predicated region
    $region77: #{forward.1} parent=5 // pred_check
      _
    $region78: #{forward.1} parent=5 // pred_check_branch
      %448 = sbr.rel (%p445) target = $region80
    $region79: #{forward.1} parent=5 // pred_region
      %s449 = ssub.s32 %s21, 1
      %p450 = scmp.lt.s32.totalorder %s26, 1
      %s451 = scalar_select %p450, %s26, 1
      %s452 = smul.addr %s451, 8
      %s453 = scalar_lea.vmem %s0, %s452
      %p454 = pneg %p47
      %p455 = pneg %p44
      %p456 = scmp.lt.s32.totalorder %s26, 1
      %s457 = scalar_select %p456, %s26, 1
      %s458 = scalar_lea.vmem %s1, %s457
      %p459 = pneg %p73
      %p460 = pneg %p70
      %p461 = pneg %p94
      %p462 = pneg %p91
      %p463 = pneg %p115
      %p464 = pneg %p112
      %p465 = pneg %p136
      %p466 = pneg %p133
      %p467 = pneg %p157
      %p468 = pneg %p154
      %p469 = pneg %p178
      %p470 = pneg %p175
      %p471 = pneg %p199
      %p472 = pneg %p196
      %p473 = pneg %p220
      %p474 = pneg %p217
      %p475 = pneg %p241
      %p476 = pneg %p238
      %p477 = pneg %p262
      %p478 = pneg %p259
      %p479 = pneg %p283
      %p480 = pneg %p280
      %p481 = pneg %p304
      %p482 = pneg %p301
      %p483 = pneg %p325
      %p484 = pneg %p322
      %p485 = pneg %p346
      %p486 = pneg %p343
      %p487 = pneg %p372
      %p488 = pneg %p369
      %p489 = scmp.lt.s32.totalorder %s26, 1
      %s490 = scalar_select %p489, %s26, 1
      %s491 = smul.addr %s490, 8
      %s492 = scalar_lea.vmem %s15, %s491
      %p493 = scmp.lt.s32.totalorder %s26, 1
      %s494 = scalar_select %p493, %s26, 1
      %s495 = smul.addr %s494, 8
      %s496 = scalar_lea.vmem %s0, %s495
      %p497 = scmp.lt.s32.totalorder %s26, 1
      %s498 = scalar_select %p497, %s26, 1
      %s499 = scalar_lea.vmem %s1, %s498
      %p500 = scmp.lt.s32.totalorder %s26, 1
      %s501 = scalar_select %p500, %s26, 1
      %s502 = smul.addr %s501, 8
      %s503 = scalar_lea.vmem %s15, %s502
      %v504 = vld [vmem:[%s496] sm:$0xff]
      %v505 = vlaneseq
      %v506 = vand.u32 %v505, 127
      %507 = vset.pattern.permute.xlu0 0
      %508 = vperm.xlu0 %507, %v504
      %v509 = vpop.permute.xlu0 %508
      %vm510 = vcmp.eq.s32.totalorder %v506, %v509
      %v511 = vsel %vm510, 1, 0
      %v512 = vcvt.s32.f32 %v511
      %v513 = vld [vmem:[%s5] sm:$0xff]
      %v514 = vld [vmem:[%s5 + $0x8] sm:$0xff]
      %v515 = vld [vmem:[%s5 + $0x10] sm:$0xff]
      %v516 = vld [vmem:[%s5 + $0x18] sm:$0xff]
      %v517 = vld [vmem:[%s5 + $0x20] sm:$0xff]
      %v518 = vld [vmem:[%s5 + $0x28] sm:$0xff]
      %v519 = vld [vmem:[%s5 + $0x30] sm:$0xff]
      %v520 = vld [vmem:[%s5 + $0x38] sm:$0xff]
      %vm521 = vcmask 523264
      %v523 = vsel %vm521, %v512, 0
      %525 = vmatpush.msra.mxu0 0.0
      %526 = vmatpush.msra.mxu0 0.0
      %527 = vmatpush.msra.mxu0 0.0
      %528 = vmatpush.msra.mxu0 0.0
      %529 = vmatpush.msra.mxu0 0.0
      %530 = vmatpush.msra.mxu0 0.0
      %531 = vmatpush.msra.mxu0 0.0
      %532 = vmatpush.msra.mxu0 0.0
      %533 = vmatpush.msra.mxu0 %v520
      %534 = vmatpush.msra.mxu0 %v519
      %535 = vmatpush.msra.mxu0 %v518
      %536 = vmatpush.msra.mxu0 %v517
      %537 = vmatpush.msra.mxu0 %v516
      %538 = vmatpush.msra.mxu0 %v515
      %539 = vmatpush.msra.mxu0 %v514
      %540 = vmatpush.msra.mxu0 %v513
      %541 = vmatmul.f32.gmra.mxu0 %v523
      %v542 = vpop.f32.mrf.mxu0
      %v543 = vadd.f32 0.0, %v542
      %544 = vdwg.mxu0
      %v545 = vlaneseq
      %v546 = vshrl.u32 %v545, 7
      %v547 = vld [vmem:[%s499] sm:$0x1]
      %vm548 = vcmp.ge.s32.totalorder %v546, %v506
      %vm549 = vcmp.gt.f32.partialorder %v547, 0.5
      %v550 = vsel %vm549, 1, 0
      %v551 = vperm.slane %v550, 0
      %vm552 = vcmp.eq.s32.totalorder %v551, 1
      %vm553 = vmand %vm548, %vm552
      %v554 = vsel %vm553, 0.0, -1e+09
      %vm555 = vcmp.ge.s32.totalorder %v506, 0
      %vm556 = vcmp.lt.s32.totalorder %v506, 8
      %vm557 = vmand %vm555, %vm556
      %v558 = vsel %vm557, 1, 0
      %v559 = vcvt.s32.f32 %v558
      %vm560 = vcmp.ge.s32.totalorder %v506, 8
      %vm561 = vcmp.lt.s32.totalorder %v506, 16
      %vm562 = vmand %vm560, %vm561
      %v563 = vsel %vm562, 1, 0
      %v564 = vcvt.s32.f32 %v563
      %vm565 = vcmp.ge.s32.totalorder %v506, 16
      %vm566 = vcmp.lt.s32.totalorder %v506, 24
      %vm567 = vmand %vm565, %vm566
      %v568 = vsel %vm567, 1, 0
      %v569 = vcvt.s32.f32 %v568
      %vm570 = vcmp.ge.s32.totalorder %v506, 24
      %vm571 = vcmp.lt.s32.totalorder %v506, 32
      %vm572 = vmand %vm570, %vm571
      %v573 = vsel %vm572, 1, 0
      %v574 = vcvt.s32.f32 %v573
      %v575 = vld [vmem:[%s2] sm:$0xff]
      %v576 = vld [vmem:[%s3] sm:$0xff]
      %v577 = vld [vmem:[%s4] sm:$0xff]
      %v578 = vld [vmem:[%s4 + $0x8] sm:$0xff]
      %v579 = vld [vmem:[%s4 + $0x10] sm:$0xff]
      %v580 = vld [vmem:[%s4 + $0x18] sm:$0xff]
      %v581 = vld [vmem:[%s4 + $0x20] sm:$0xff]
      %v582 = vld [vmem:[%s4 + $0x28] sm:$0xff]
      %v583 = vld [vmem:[%s4 + $0x30] sm:$0xff]
      %v584 = vld [vmem:[%s4 + $0x38] sm:$0xff]
      %v585 = vld [vmem:[%s4 + $0x40] sm:$0xff]
      %v586 = vld [vmem:[%s4 + $0x48] sm:$0xff]
      %v587 = vld [vmem:[%s4 + $0x50] sm:$0xff]
      %v588 = vld [vmem:[%s4 + $0x58] sm:$0xff]
      %v589 = vld [vmem:[%s4 + $0x60] sm:$0xff]
      %v590 = vld [vmem:[%s4 + $0x68] sm:$0xff]
      %v591 = vld [vmem:[%s4 + $0x70] sm:$0xff]
      %v592 = vld [vmem:[%s4 + $0x78] sm:$0xff]
      %v593 = vld [vmem:[%s6] sm:$0x1]
      %v594 = vmul.f32 %v543, %v543
      %vm595 = vcmask 261120
      %v596 = vsel %vm595, %v594, 0.0
      %597 = vadd.xlane.f32.xlu0 %v596
      %v598 = vpop.xlane.xlu0 %597
      %v599 = vrcp.pop 32.0
      %v600 = vmul.f32 32.0, %v599
      %v601 = vsub.f32 1.0, %v600
      %v602 = vmul.f32 %v599, %v601
      %v603 = vadd.f32 %v599, %v602
      %vm604 = vweird.f32 %v599
      %v605 = vsel %vm604, %v599, %v603
      %v606 = vmul.f32 %v598, %v605
      %v607 = vadd.f32 %v606, 1e-06
      %v608 = vrsqrt.pop %v607
      %v609 = vmul.f32 %v608, %v607
      %v610 = vmul.f32 %v609, %v608
      %v611 = vmul.f32 0.5, %v610
      %v612 = vsub.f32 1.5, %v611
      %v613 = vmul.f32 %v608, %v612
      %vm614 = vweird.f32 %v607
      %vm615 = vweird.f32 %v608
      %vm616 = vmor %vm614, %vm615
      %v617 = vsel %vm616, %v608, %v613
      %v618 = vmul.f32 %v543, %v617
      %v620 = vperm.slane %v593, 0
      %v622 = vmul.f32 %v618, %v620
      %v623 = vld [vmem:[%s7] sm:$0xff]
      %v624 = vld [vmem:[%s7 + $0x8] sm:$0xff]
      %v625 = vld [vmem:[%s7 + $0x10] sm:$0xff]
      %v626 = vld [vmem:[%s7 + $0x18] sm:$0xff]
      %v627 = vld [vmem:[%s7 + $0x20] sm:$0xff]
      %v628 = vld [vmem:[%s7 + $0x28] sm:$0xff]
      %v629 = vld [vmem:[%s7 + $0x30] sm:$0xff]
      %v630 = vld [vmem:[%s7 + $0x38] sm:$0xff]
      %v631 = vld [vmem:[%s7 + $0x40] sm:$0xff]
      %v632 = vld [vmem:[%s7 + $0x48] sm:$0xff]
      %v633 = vld [vmem:[%s7 + $0x50] sm:$0xff]
      %v634 = vld [vmem:[%s7 + $0x58] sm:$0xff]
      %v636 = vsel %vm595, %v622, 0
      %638 = vmatpush.msra.mxu0 0.0
      %639 = vmatpush.msra.mxu0 0.0
      %640 = vmatpush.msra.mxu0 0.0
      %641 = vmatpush.msra.mxu0 0.0
      %642 = vmatpush.msra.mxu0 0.0
      %643 = vmatpush.msra.mxu0 0.0
      %644 = vmatpush.msra.mxu0 0.0
      %645 = vmatpush.msra.mxu0 0.0
      %646 = vmatpush.msra.mxu0 0.0
      %647 = vmatpush.msra.mxu0 0.0
      %648 = vmatpush.msra.mxu0 0.0
      %649 = vmatpush.msra.mxu0 0.0
      %650 = vmatpush.msra.mxu0 %v632
      %651 = vmatpush.msra.mxu0 %v629
      %652 = vmatpush.msra.mxu0 %v626
      %653 = vmatpush.msra.mxu0 %v623
      %654 = vmatmul.f32.gmra.mxu0 %v636
      %v655 = vpop.f32.mrf.mxu0
      %v656 = vadd.f32 0.0, %v655
      %657 = vdwg.mxu0
      %658 = vmatpush.msra.mxu0 0.0
      %659 = vmatpush.msra.mxu0 0.0
      %660 = vmatpush.msra.mxu0 0.0
      %661 = vmatpush.msra.mxu0 0.0
      %662 = vmatpush.msra.mxu0 0.0
      %663 = vmatpush.msra.mxu0 0.0
      %664 = vmatpush.msra.mxu0 0.0
      %665 = vmatpush.msra.mxu0 0.0
      %666 = vmatpush.msra.mxu0 0.0
      %667 = vmatpush.msra.mxu0 0.0
      %668 = vmatpush.msra.mxu0 0.0
      %669 = vmatpush.msra.mxu0 0.0
      %670 = vmatpush.msra.mxu0 %v633
      %671 = vmatpush.msra.mxu0 %v630
      %672 = vmatpush.msra.mxu0 %v627
      %673 = vmatpush.msra.mxu0 %v624
      %674 = vmatmul.f32.gmra.mxu0 %v636
      %v675 = vpop.f32.mrf.mxu0
      %v676 = vadd.f32 0.0, %v675
      %677 = vdwg.mxu0
      %678 = vmatpush.msra.mxu0 0.0
      %679 = vmatpush.msra.mxu0 0.0
      %680 = vmatpush.msra.mxu0 0.0
      %681 = vmatpush.msra.mxu0 0.0
      %682 = vmatpush.msra.mxu0 0.0
      %683 = vmatpush.msra.mxu0 0.0
      %684 = vmatpush.msra.mxu0 0.0
      %685 = vmatpush.msra.mxu0 0.0
      %686 = vmatpush.msra.mxu0 0.0
      %687 = vmatpush.msra.mxu0 0.0
      %688 = vmatpush.msra.mxu0 0.0
      %689 = vmatpush.msra.mxu0 0.0
      %690 = vmatpush.msra.mxu0 %v634
      %691 = vmatpush.msra.mxu0 %v631
      %692 = vmatpush.msra.mxu0 %v628
      %693 = vmatpush.msra.mxu0 %v625
      %694 = vmatmul.f32.gmra.mxu0 %v636
      %v695 = vpop.f32.mrf.mxu0
      %v696 = vadd.f32 0.0, %v695
      %697 = vdwg.mxu0
      %v698 = vmul.f32 %v656, %v575
      %699 = vmatpush.msra.mxu0 %v592
      %700 = vmatpush.msra.mxu0 %v591
      %701 = vmatpush.msra.mxu0 %v590
      %702 = vmatpush.msra.mxu0 %v589
      %703 = vmatpush.msra.mxu0 %v588
      %704 = vmatpush.msra.mxu0 %v587
      %705 = vmatpush.msra.mxu0 %v586
      %706 = vmatpush.msra.mxu0 %v585
      %707 = vmatpush.msra.mxu0 %v584
      %708 = vmatpush.msra.mxu0 %v583
      %709 = vmatpush.msra.mxu0 %v582
      %710 = vmatpush.msra.mxu0 %v581
      %711 = vmatpush.msra.mxu0 %v580
      %712 = vmatpush.msra.mxu0 %v579
      %713 = vmatpush.msra.mxu0 %v578
      %714 = vmatpush.msra.mxu0 %v577
      %715 = vmatmul.f32.gmra.mxu0 %v656
      %v716 = vpop.f32.mrf.mxu0
      %v717 = vadd.f32 0.0, %v716
      %718 = vdwg.mxu0
      %v719 = vmul.f32 %v717, %v576
      %v720 = vadd.f32 %v698, %v719
      %v721 = vmul.f32 %v676, %v575
      %722 = vmatpush.msra.mxu0 %v592
      %723 = vmatpush.msra.mxu0 %v591
      %724 = vmatpush.msra.mxu0 %v590
      %725 = vmatpush.msra.mxu0 %v589
      %726 = vmatpush.msra.mxu0 %v588
      %727 = vmatpush.msra.mxu0 %v587
      %728 = vmatpush.msra.mxu0 %v586
      %729 = vmatpush.msra.mxu0 %v585
      %730 = vmatpush.msra.mxu0 %v584
      %731 = vmatpush.msra.mxu0 %v583
      %732 = vmatpush.msra.mxu0 %v582
      %733 = vmatpush.msra.mxu0 %v581
      %734 = vmatpush.msra.mxu0 %v580
      %735 = vmatpush.msra.mxu0 %v579
      %736 = vmatpush.msra.mxu0 %v578
      %737 = vmatpush.msra.mxu0 %v577
      %738 = vmatmul.f32.gmra.mxu0 %v676
      %v739 = vpop.f32.mrf.mxu0
      %v740 = vadd.f32 0.0, %v739
      %741 = vdwg.mxu0
      %v742 = vmul.f32 %v740, %v576
      %v743 = vadd.f32 %v721, %v742
      %v744 = vmul.f32 %v720, %v559
      %745 = vmatpush.xpose.msra.mxu0 0.0
      %746 = vmatpush.xpose.msra.mxu0 0.0
      %747 = vmatpush.xpose.msra.mxu0 0.0
      %748 = vmatpush.xpose.msra.mxu0 0.0
      %749 = vmatpush.xpose.msra.mxu0 0.0
      %750 = vmatpush.xpose.msra.mxu0 0.0
      %751 = vmatpush.xpose.msra.mxu0 0.0
      %752 = vmatpush.xpose.msra.mxu0 0.0
      %753 = vmatpush.xpose.msra.mxu0 0.0
      %754 = vmatpush.xpose.msra.mxu0 0.0
      %755 = vmatpush.xpose.msra.mxu0 0.0
      %756 = vmatpush.xpose.msra.mxu0 0.0
      %757 = vmatpush.xpose.msra.mxu0 0.0
      %758 = vmatpush.xpose.msra.mxu0 0.0
      %759 = vmatpush.xpose.msra.mxu0 0.0
      %760 = vmatpush.xpose.msra.mxu0 %v743
      %761 = vmatmul.f32.gmra.mxu0 %v744
      %v762 = vpop.f32.mrf.mxu0
      %v763 = vadd.f32 0.0, %v762
      %764 = vdwg.mxu0
      %v765 = vmul.f32 %v763, 0.35355338
      %v766 = vadd.f32 %v765, %v554
      %vm767 = vcmask 64512
      %v768 = vsel %vm767, %v766, -inf
      %769 = vmax.xlane.f32.xlu0 %v768
      %v770 = vpop.xlane.xlu0 %769
      %v771 = vsub.f32 %v766, %v770
      %v772 = vmul.f32 %v771, 1.442695
      %v773 = vpow.pop %v772
      %v774 = vsel %vm767, %v773, 0.0
      %775 = vadd.xlane.f32.xlu0 %v774
      %v776 = vpop.xlane.xlu0 %775
      %v777 = vrcp.pop %v776
      %v778 = vmul.f32 %v776, %v777
      %v779 = vsub.f32 1.0, %v778
      %v780 = vmul.f32 %v777, %v779
      %v781 = vadd.f32 %v777, %v780
      %vm782 = vweird.f32 %v776
      %vm783 = vweird.f32 %v777
      %vm784 = vmor %vm782, %vm783
      %v785 = vsel %vm784, %v777, %v781
      %v786 = vand.u32 2147483647, %v776
      %vm787 = vcmp.eq.f32.partialorder %v786, 8.507059e+37
      %v788 = vand.u32 %v776, 2147483648
      %v789 = vor.u32 1.1754944e-38, %v788
      %v790 = vsel %vm787, %v789, %v785
      %v791 = vmul.f32 %v773, %v790
      %v792 = vmul.f32 %v696, %v559
      %v793 = vmul.f32 %v720, %v564
      %794 = vmatpush.xpose.msra.mxu0 0.0
      %795 = vmatpush.xpose.msra.mxu0 0.0
      %796 = vmatpush.xpose.msra.mxu0 0.0
      %797 = vmatpush.xpose.msra.mxu0 0.0
      %798 = vmatpush.xpose.msra.mxu0 0.0
      %799 = vmatpush.xpose.msra.mxu0 0.0
      %800 = vmatpush.xpose.msra.mxu0 0.0
      %801 = vmatpush.xpose.msra.mxu0 0.0
      %802 = vmatpush.xpose.msra.mxu0 0.0
      %803 = vmatpush.xpose.msra.mxu0 0.0
      %804 = vmatpush.xpose.msra.mxu0 0.0
      %805 = vmatpush.xpose.msra.mxu0 0.0
      %806 = vmatpush.xpose.msra.mxu0 0.0
      %807 = vmatpush.xpose.msra.mxu0 0.0
      %808 = vmatpush.xpose.msra.mxu0 0.0
      %809 = vmatpush.xpose.msra.mxu0 %v743
      %810 = vmatmul.f32.gmra.mxu0 %v793
      %v811 = vpop.f32.mrf.mxu0
      %v812 = vadd.f32 0.0, %v811
      %813 = vdwg.mxu0
      %v814 = vmul.f32 %v812, 0.35355338
      %v815 = vadd.f32 %v814, %v554
      %v816 = vsel %vm767, %v815, -inf
      %817 = vmax.xlane.f32.xlu0 %v816
      %v818 = vpop.xlane.xlu0 %817
      %v819 = vsub.f32 %v815, %v818
      %v820 = vmul.f32 %v819, 1.442695
      %v821 = vpow.pop %v820
      %v822 = vsel %vm767, %v821, 0.0
      %823 = vadd.xlane.f32.xlu0 %v822
      %v824 = vpop.xlane.xlu0 %823
      %v825 = vrcp.pop %v824
      %v826 = vmul.f32 %v824, %v825
      %v827 = vsub.f32 1.0, %v826
      %v828 = vmul.f32 %v825, %v827
      %v829 = vadd.f32 %v825, %v828
      %vm830 = vweird.f32 %v824
      %vm831 = vweird.f32 %v825
      %vm832 = vmor %vm830, %vm831
      %v833 = vsel %vm832, %v825, %v829
      %v834 = vand.u32 2147483647, %v824
      %vm835 = vcmp.eq.f32.partialorder %v834, 8.507059e+37
      %v836 = vand.u32 %v824, 2147483648
      %v837 = vor.u32 1.1754944e-38, %v836
      %v838 = vsel %vm835, %v837, %v833
      %v839 = vmul.f32 %v821, %v838
      %v840 = vmul.f32 %v696, %v564
      %v842 = vsel %vm767, %v839, 0
      %844 = vmatpush.msra.mxu0 0.0
      %845 = vmatpush.msra.mxu0 0.0
      %846 = vmatpush.msra.mxu0 0.0
      %847 = vmatpush.msra.mxu0 0.0
      %848 = vmatpush.msra.mxu0 0.0
      %849 = vmatpush.msra.mxu0 0.0
      %850 = vmatpush.msra.mxu0 0.0
      %851 = vmatpush.msra.mxu0 0.0
      %852 = vmatpush.msra.mxu0 0.0
      %853 = vmatpush.msra.mxu0 0.0
      %854 = vmatpush.msra.mxu0 0.0
      %855 = vmatpush.msra.mxu0 0.0
      %856 = vmatpush.msra.mxu0 0.0
      %857 = vmatpush.msra.mxu0 0.0
      %858 = vmatpush.msra.mxu0 0.0
      %859 = vmatpush.msra.mxu0 %v840
      %860 = vmatmul.f32.gmra.mxu0 %v842
      %v861 = vpop.f32.mrf.mxu0
      %v862 = vadd.f32 0.0, %v861
      %863 = vdwg.mxu0
      %v865 = vsel %vm767, %v791, 0
      %867 = vmatpush.msra.mxu0 0.0
      %868 = vmatpush.msra.mxu0 0.0
      %869 = vmatpush.msra.mxu0 0.0
      %870 = vmatpush.msra.mxu0 0.0
      %871 = vmatpush.msra.mxu0 0.0
      %872 = vmatpush.msra.mxu0 0.0
      %873 = vmatpush.msra.mxu0 0.0
      %874 = vmatpush.msra.mxu0 0.0
      %875 = vmatpush.msra.mxu0 0.0
      %876 = vmatpush.msra.mxu0 0.0
      %877 = vmatpush.msra.mxu0 0.0
      %878 = vmatpush.msra.mxu0 0.0
      %879 = vmatpush.msra.mxu0 0.0
      %880 = vmatpush.msra.mxu0 0.0
      %881 = vmatpush.msra.mxu0 0.0
      %882 = vmatpush.msra.mxu0 %v792
      %883 = vmatmul.f32.gmra.mxu0 %v865
      %v884 = vpop.f32.mrf.mxu0
      %v885 = vadd.f32 %v862, %v884
      %886 = vdwg.mxu0
      %v887 = vmul.f32 %v720, %v569
      %888 = vmatpush.xpose.msra.mxu0 0.0
      %889 = vmatpush.xpose.msra.mxu0 0.0
      %890 = vmatpush.xpose.msra.mxu0 0.0
      %891 = vmatpush.xpose.msra.mxu0 0.0
      %892 = vmatpush.xpose.msra.mxu0 0.0
      %893 = vmatpush.xpose.msra.mxu0 0.0
      %894 = vmatpush.xpose.msra.mxu0 0.0
      %895 = vmatpush.xpose.msra.mxu0 0.0
      %896 = vmatpush.xpose.msra.mxu0 0.0
      %897 = vmatpush.xpose.msra.mxu0 0.0
      %898 = vmatpush.xpose.msra.mxu0 0.0
      %899 = vmatpush.xpose.msra.mxu0 0.0
      %900 = vmatpush.xpose.msra.mxu0 0.0
      %901 = vmatpush.xpose.msra.mxu0 0.0
      %902 = vmatpush.xpose.msra.mxu0 0.0
      %903 = vmatpush.xpose.msra.mxu0 %v743
      %904 = vmatmul.f32.gmra.mxu0 %v887
      %v905 = vpop.f32.mrf.mxu0
      %v906 = vadd.f32 0.0, %v905
      %907 = vdwg.mxu0
      %v908 = vmul.f32 %v906, 0.35355338
      %v909 = vadd.f32 %v908, %v554
      %v910 = vsel %vm767, %v909, -inf
      %911 = vmax.xlane.f32.xlu0 %v910
      %v912 = vpop.xlane.xlu0 %911
      %v913 = vsub.f32 %v909, %v912
      %v914 = vmul.f32 %v913, 1.442695
      %v915 = vpow.pop %v914
      %v916 = vsel %vm767, %v915, 0.0
      %917 = vadd.xlane.f32.xlu0 %v916
      %v918 = vpop.xlane.xlu0 %917
      %v919 = vrcp.pop %v918
      %v920 = vmul.f32 %v918, %v919
      %v921 = vsub.f32 1.0, %v920
      %v922 = vmul.f32 %v919, %v921
      %v923 = vadd.f32 %v919, %v922
      %vm924 = vweird.f32 %v918
      %vm925 = vweird.f32 %v919
      %vm926 = vmor %vm924, %vm925
      %v927 = vsel %vm926, %v919, %v923
      %v928 = vand.u32 2147483647, %v918
      %vm929 = vcmp.eq.f32.partialorder %v928, 8.507059e+37
      %v930 = vand.u32 %v918, 2147483648
      %v931 = vor.u32 1.1754944e-38, %v930
      %v932 = vsel %vm929, %v931, %v927
      %v933 = vmul.f32 %v915, %v932
      %v934 = vmul.f32 %v696, %v569
      %v936 = vsel %vm767, %v933, 0
      %938 = vmatpush.msra.mxu0 0.0
      %939 = vmatpush.msra.mxu0 0.0
      %940 = vmatpush.msra.mxu0 0.0
      %941 = vmatpush.msra.mxu0 0.0
      %942 = vmatpush.msra.mxu0 0.0
      %943 = vmatpush.msra.mxu0 0.0
      %944 = vmatpush.msra.mxu0 0.0
      %945 = vmatpush.msra.mxu0 0.0
      %946 = vmatpush.msra.mxu0 0.0
      %947 = vmatpush.msra.mxu0 0.0
      %948 = vmatpush.msra.mxu0 0.0
      %949 = vmatpush.msra.mxu0 0.0
      %950 = vmatpush.msra.mxu0 0.0
      %951 = vmatpush.msra.mxu0 0.0
      %952 = vmatpush.msra.mxu0 0.0
      %953 = vmatpush.msra.mxu0 %v934
      %954 = vmatmul.f32.gmra.mxu0 %v936
      %v955 = vpop.f32.mrf.mxu0
      %v956 = vadd.f32 0.0, %v955
      %957 = vdwg.mxu0
      %v958 = vadd.f32 %v885, %v956
      %v959 = vmul.f32 %v720, %v574
      %960 = vmatpush.xpose.msra.mxu0 0.0
      %961 = vmatpush.xpose.msra.mxu0 0.0
      %962 = vmatpush.xpose.msra.mxu0 0.0
      %963 = vmatpush.xpose.msra.mxu0 0.0
      %964 = vmatpush.xpose.msra.mxu0 0.0
      %965 = vmatpush.xpose.msra.mxu0 0.0
      %966 = vmatpush.xpose.msra.mxu0 0.0
      %967 = vmatpush.xpose.msra.mxu0 0.0
      %968 = vmatpush.xpose.msra.mxu0 0.0
      %969 = vmatpush.xpose.msra.mxu0 0.0
      %970 = vmatpush.xpose.msra.mxu0 0.0
      %971 = vmatpush.xpose.msra.mxu0 0.0
      %972 = vmatpush.xpose.msra.mxu0 0.0
      %973 = vmatpush.xpose.msra.mxu0 0.0
      %974 = vmatpush.xpose.msra.mxu0 0.0
      %975 = vmatpush.xpose.msra.mxu0 %v743
      %976 = vmatmul.f32.gmra.mxu0 %v959
      %v977 = vpop.f32.mrf.mxu0
      %v978 = vadd.f32 0.0, %v977
      %979 = vdwg.mxu0
      %v980 = vmul.f32 %v978, 0.35355338
      %v981 = vadd.f32 %v980, %v554
      %v982 = vsel %vm767, %v981, -inf
      %983 = vmax.xlane.f32.xlu0 %v982
      %v984 = vpop.xlane.xlu0 %983
      %v985 = vsub.f32 %v981, %v984
      %v986 = vmul.f32 %v985, 1.442695
      %v987 = vpow.pop %v986
      %v988 = vsel %vm767, %v987, 0.0
      %989 = vadd.xlane.f32.xlu0 %v988
      %v990 = vpop.xlane.xlu0 %989
      %v991 = vrcp.pop %v990
      %v992 = vmul.f32 %v990, %v991
      %v993 = vsub.f32 1.0, %v992
      %v994 = vmul.f32 %v991, %v993
      %v995 = vadd.f32 %v991, %v994
      %vm996 = vweird.f32 %v990
      %vm997 = vweird.f32 %v991
      %vm998 = vmor %vm996, %vm997
      %v999 = vsel %vm998, %v991, %v995
      %v1000 = vand.u32 2147483647, %v990
      %vm1001 = vcmp.eq.f32.partialorder %v1000, 8.507059e+37
      %v1002 = vand.u32 %v990, 2147483648
      %v1003 = vor.u32 1.1754944e-38, %v1002
      %v1004 = vsel %vm1001, %v1003, %v999
      %v1005 = vmul.f32 %v987, %v1004
      %v1006 = vmul.f32 %v696, %v574
      %v1008 = vsel %vm767, %v1005, 0
      %1010 = vmatpush.msra.mxu0 0.0
      %1011 = vmatpush.msra.mxu0 0.0
      %1012 = vmatpush.msra.mxu0 0.0
      %1013 = vmatpush.msra.mxu0 0.0
      %1014 = vmatpush.msra.mxu0 0.0
      %1015 = vmatpush.msra.mxu0 0.0
      %1016 = vmatpush.msra.mxu0 0.0
      %1017 = vmatpush.msra.mxu0 0.0
      %1018 = vmatpush.msra.mxu0 0.0
      %1019 = vmatpush.msra.mxu0 0.0
      %1020 = vmatpush.msra.mxu0 0.0
      %1021 = vmatpush.msra.mxu0 0.0
      %1022 = vmatpush.msra.mxu0 0.0
      %1023 = vmatpush.msra.mxu0 0.0
      %1024 = vmatpush.msra.mxu0 0.0
      %1025 = vmatpush.msra.mxu0 %v1006
      %1026 = vmatmul.f32.gmra.mxu0 %v1008
      %v1027 = vpop.f32.mrf.mxu0
      %v1028 = vadd.f32 0.0, %v1027
      %1029 = vdwg.mxu0
      %v1030 = vadd.f32 %v958, %v1028
      %v1031 = vld [vmem:[%s8] sm:$0xff]
      %v1032 = vld [vmem:[%s8 + $0x8] sm:$0xff]
      %v1033 = vld [vmem:[%s8 + $0x10] sm:$0xff]
      %v1034 = vld [vmem:[%s8 + $0x18] sm:$0xff]
      %v1035 = vld [vmem:[%s8 + $0x20] sm:$0xff]
      %v1036 = vld [vmem:[%s8 + $0x28] sm:$0xff]
      %v1037 = vld [vmem:[%s8 + $0x30] sm:$0xff]
      %v1038 = vld [vmem:[%s8 + $0x38] sm:$0xff]
      %v1039 = vld [vmem:[%s8 + $0x40] sm:$0xff]
      %v1040 = vld [vmem:[%s8 + $0x48] sm:$0xff]
      %v1041 = vld [vmem:[%s8 + $0x50] sm:$0xff]
      %v1042 = vld [vmem:[%s8 + $0x58] sm:$0xff]
      %v1043 = vld [vmem:[%s8 + $0x60] sm:$0xff]
      %v1044 = vld [vmem:[%s8 + $0x68] sm:$0xff]
      %v1045 = vld [vmem:[%s8 + $0x70] sm:$0xff]
      %v1046 = vld [vmem:[%s8 + $0x78] sm:$0xff]
      %1047 = vmatpush.msra.mxu0 %v1046
      %1048 = vmatpush.msra.mxu0 %v1045
      %1049 = vmatpush.msra.mxu0 %v1044
      %1050 = vmatpush.msra.mxu0 %v1043
      %1051 = vmatpush.msra.mxu0 %v1042
      %1052 = vmatpush.msra.mxu0 %v1041
      %1053 = vmatpush.msra.mxu0 %v1040
      %1054 = vmatpush.msra.mxu0 %v1039
      %1055 = vmatpush.msra.mxu0 %v1038
      %1056 = vmatpush.msra.mxu0 %v1037
      %1057 = vmatpush.msra.mxu0 %v1036
      %1058 = vmatpush.msra.mxu0 %v1035
      %1059 = vmatpush.msra.mxu0 %v1034
      %1060 = vmatpush.msra.mxu0 %v1033
      %1061 = vmatpush.msra.mxu0 %v1032
      %1062 = vmatpush.msra.mxu0 %v1031
      %1063 = vmatmul.f32.gmra.mxu0 %v1030
      %v1064 = vpop.f32.mrf.mxu0
      %v1065 = vadd.f32 0.0, %v1064
      %1066 = vdwg.mxu0
      %v1067 = vadd.f32 %v543, %v1065
      %v1068 = vld [vmem:[%s9] sm:$0x1]
      %v1069 = vmul.f32 %v1067, %v1067
      %v1070 = vsel %vm595, %v1069, 0.0
      %1071 = vadd.xlane.f32.xlu0 %v1070
      %v1072 = vpop.xlane.xlu0 %1071
      %v1073 = vmul.f32 %v1072, %v605
      %v1074 = vadd.f32 %v1073, 1e-06
      %v1075 = vrsqrt.pop %v1074
      %v1076 = vmul.f32 %v1075, %v1074
      %v1077 = vmul.f32 %v1076, %v1075
      %v1078 = vmul.f32 0.5, %v1077
      %v1079 = vsub.f32 1.5, %v1078
      %v1080 = vmul.f32 %v1075, %v1079
      %vm1081 = vweird.f32 %v1074
      %vm1082 = vweird.f32 %v1075
      %vm1083 = vmor %vm1081, %vm1082
      %v1084 = vsel %vm1083, %v1075, %v1080
      %v1085 = vmul.f32 %v1067, %v1084
      %v1087 = vperm.slane %v1068, 0
      %v1089 = vmul.f32 %v1085, %v1087
      %v1090 = vld [vmem:[%s10] sm:$0xff]
      %v1091 = vld [vmem:[%s10 + $0x8] sm:$0xff]
      %v1092 = vld [vmem:[%s10 + $0x10] sm:$0xff]
      %v1093 = vld [vmem:[%s10 + $0x18] sm:$0xff]
      %v1094 = vld [vmem:[%s10 + $0x20] sm:$0xff]
      %v1095 = vld [vmem:[%s10 + $0x28] sm:$0xff]
      %v1096 = vld [vmem:[%s10 + $0x30] sm:$0xff]
      %v1097 = vld [vmem:[%s10 + $0x38] sm:$0xff]
      %v1099 = vsel %vm595, %v1089, 0
      %1101 = vmatpush.msra.mxu0 0.0
      %1102 = vmatpush.msra.mxu0 0.0
      %1103 = vmatpush.msra.mxu0 0.0
      %1104 = vmatpush.msra.mxu0 0.0
      %1105 = vmatpush.msra.mxu0 0.0
      %1106 = vmatpush.msra.mxu0 0.0
      %1107 = vmatpush.msra.mxu0 0.0
      %1108 = vmatpush.msra.mxu0 0.0
      %1109 = vmatpush.msra.mxu0 0.0
      %1110 = vmatpush.msra.mxu0 0.0
      %1111 = vmatpush.msra.mxu0 0.0
      %1112 = vmatpush.msra.mxu0 0.0
      %1113 = vmatpush.msra.mxu0 %v1096
      %1114 = vmatpush.msra.mxu0 %v1094
      %1115 = vmatpush.msra.mxu0 %v1092
      %1116 = vmatpush.msra.mxu0 %v1090
      %1117 = vmatmul.f32.gmra.mxu0 %v1099
      %v1118 = vpop.f32.mrf.mxu0
      %v1119 = vadd.f32 0.0, %v1118
      %1120 = vdwg.mxu0
      %1121 = vmatpush.msra.mxu0 0.0
      %1122 = vmatpush.msra.mxu0 0.0
      %1123 = vmatpush.msra.mxu0 0.0
      %1124 = vmatpush.msra.mxu0 0.0
      %1125 = vmatpush.msra.mxu0 0.0
      %1126 = vmatpush.msra.mxu0 0.0
      %1127 = vmatpush.msra.mxu0 0.0
      %1128 = vmatpush.msra.mxu0 0.0
      %1129 = vmatpush.msra.mxu0 0.0
      %1130 = vmatpush.msra.mxu0 0.0
      %1131 = vmatpush.msra.mxu0 0.0
      %1132 = vmatpush.msra.mxu0 0.0
      %1133 = vmatpush.msra.mxu0 %v1097
      %1134 = vmatpush.msra.mxu0 %v1095
      %1135 = vmatpush.msra.mxu0 %v1093
      %1136 = vmatpush.msra.mxu0 %v1091
      %1137 = vmatmul.f32.gmra.mxu0 %v1099
      %v1138 = vpop.f32.mrf.mxu0
      %v1139 = vadd.f32 0.0, %v1138
      %1140 = vdwg.mxu0
      %v1141 = vxor.u32 %v1119, 2147483648
      %v1142 = vmul.f32 %v1141, 1.442695
      %v1143 = vpow.pop %v1142
      %v1144 = vadd.f32 %v1143, 1.0
      %v1145 = vrcp.pop %v1144
      %v1146 = vmul.f32 %v1144, %v1145
      %v1147 = vsub.f32 1.0, %v1146
      %v1148 = vmul.f32 %v1145, %v1147
      %v1149 = vadd.f32 %v1145, %v1148
      %vm1150 = vweird.f32 %v1144
      %vm1151 = vweird.f32 %v1145
      %vm1152 = vmor %vm1150, %vm1151
      %v1153 = vsel %vm1152, %v1145, %v1149
      %v1154 = vand.u32 2147483647, %v1144
      %vm1155 = vcmp.eq.f32.partialorder %v1154, 8.507059e+37
      %v1156 = vand.u32 %v1144, 2147483648
      %v1157 = vor.u32 1.1754944e-38, %v1156
      %v1158 = vsel %vm1155, %v1157, %v1153
      %v1159 = vmul.f32 1.0, %v1158
      %v1160 = vmul.f32 %v1119, %v1159
      %v1161 = vmul.f32 %v1160, %v1139
      %v1162 = vld [vmem:[%s11] sm:$0xff]
      %v1163 = vld [vmem:[%s11 + $0x8] sm:$0xff]
      %v1164 = vld [vmem:[%s11 + $0x10] sm:$0xff]
      %v1165 = vld [vmem:[%s11 + $0x18] sm:$0xff]
      %v1166 = vld [vmem:[%s11 + $0x20] sm:$0xff]
      %v1167 = vld [vmem:[%s11 + $0x28] sm:$0xff]
      %v1168 = vld [vmem:[%s11 + $0x30] sm:$0xff]
      %v1169 = vld [vmem:[%s11 + $0x38] sm:$0xff]
      %v1170 = vld [vmem:[%s11 + $0x40] sm:$0xff]
      %v1171 = vld [vmem:[%s11 + $0x48] sm:$0xff]
      %v1172 = vld [vmem:[%s11 + $0x50] sm:$0xff]
      %v1173 = vld [vmem:[%s11 + $0x58] sm:$0xff]
      %v1174 = vld [vmem:[%s11 + $0x60] sm:$0xff]
      %v1175 = vld [vmem:[%s11 + $0x68] sm:$0xff]
      %v1176 = vld [vmem:[%s11 + $0x70] sm:$0xff]
      %v1177 = vld [vmem:[%s11 + $0x78] sm:$0xff]
      %1178 = vmatpush.msra.mxu0 %v1177
      %1179 = vmatpush.msra.mxu0 %v1176
      %1180 = vmatpush.msra.mxu0 %v1175
      %1181 = vmatpush.msra.mxu0 %v1174
      %1182 = vmatpush.msra.mxu0 %v1173
      %1183 = vmatpush.msra.mxu0 %v1172
      %1184 = vmatpush.msra.mxu0 %v1171
      %1185 = vmatpush.msra.mxu0 %v1170
      %1186 = vmatpush.msra.mxu0 %v1169
      %1187 = vmatpush.msra.mxu0 %v1168
      %1188 = vmatpush.msra.mxu0 %v1167
      %1189 = vmatpush.msra.mxu0 %v1166
      %1190 = vmatpush.msra.mxu0 %v1165
      %1191 = vmatpush.msra.mxu0 %v1164
      %1192 = vmatpush.msra.mxu0 %v1163
      %1193 = vmatpush.msra.mxu0 %v1162
      %1194 = vmatmul.f32.gmra.mxu0 %v1161
      %v1195 = vpop.f32.mrf.mxu0
      %v1196 = vadd.f32 0.0, %v1195
      %1197 = vdwg.mxu0
      %v1198 = vadd.f32 %v1067, %v1196
      %s1199 = scalar_lea.vmem %s6, 1
      %v1200 = vld [vmem:[%s1199] sm:$0x1]
      %v1201 = vmul.f32 %v1198, %v1198
      %v1202 = vsel %vm595, %v1201, 0.0
      %1203 = vadd.xlane.f32.xlu0 %v1202
      %v1204 = vpop.xlane.xlu0 %1203
      %v1205 = vmul.f32 %v1204, %v605
      %v1206 = vadd.f32 %v1205, 1e-06
      %v1207 = vrsqrt.pop %v1206
      %v1208 = vmul.f32 %v1207, %v1206
      %v1209 = vmul.f32 %v1208, %v1207
      %v1210 = vmul.f32 0.5, %v1209
      %v1211 = vsub.f32 1.5, %v1210
      %v1212 = vmul.f32 %v1207, %v1211
      %vm1213 = vweird.f32 %v1206
      %vm1214 = vweird.f32 %v1207
      %vm1215 = vmor %vm1213, %vm1214
      %v1216 = vsel %vm1215, %v1207, %v1212
      %v1217 = vmul.f32 %v1198, %v1216
      %v1219 = vperm.slane %v1200, 0
      %v1221 = vmul.f32 %v1217, %v1219
      %s1222 = scalar_lea.vmem %s7, 96
      %v1223 = vld [vmem:[%s1222] sm:$0xff]
      %v1224 = vld [vmem:[%s1222 + $0x8] sm:$0xff]
      %v1225 = vld [vmem:[%s1222 + $0x10] sm:$0xff]
      %v1226 = vld [vmem:[%s1222 + $0x18] sm:$0xff]
      %v1227 = vld [vmem:[%s1222 + $0x20] sm:$0xff]
      %v1228 = vld [vmem:[%s1222 + $0x28] sm:$0xff]
      %v1229 = vld [vmem:[%s1222 + $0x30] sm:$0xff]
      %v1230 = vld [vmem:[%s1222 + $0x38] sm:$0xff]
      %v1231 = vld [vmem:[%s1222 + $0x40] sm:$0xff]
      %v1232 = vld [vmem:[%s1222 + $0x48] sm:$0xff]
      %v1233 = vld [vmem:[%s1222 + $0x50] sm:$0xff]
      %v1234 = vld [vmem:[%s1222 + $0x58] sm:$0xff]
      %v1236 = vsel %vm595, %v1221, 0
      %1238 = vmatpush.msra.mxu0 0.0
      %1239 = vmatpush.msra.mxu0 0.0
      %1240 = vmatpush.msra.mxu0 0.0
      %1241 = vmatpush.msra.mxu0 0.0
      %1242 = vmatpush.msra.mxu0 0.0
      %1243 = vmatpush.msra.mxu0 0.0
      %1244 = vmatpush.msra.mxu0 0.0
      %1245 = vmatpush.msra.mxu0 0.0
      %1246 = vmatpush.msra.mxu0 0.0
      %1247 = vmatpush.msra.mxu0 0.0
      %1248 = vmatpush.msra.mxu0 0.0
      %1249 = vmatpush.msra.mxu0 0.0
      %1250 = vmatpush.msra.mxu0 %v1232
      %1251 = vmatpush.msra.mxu0 %v1229
      %1252 = vmatpush.msra.mxu0 %v1226
      %1253 = vmatpush.msra.mxu0 %v1223
      %1254 = vmatmul.f32.gmra.mxu0 %v1236
      %v1255 = vpop.f32.mrf.mxu0
      %v1256 = vadd.f32 0.0, %v1255
      %1257 = vdwg.mxu0
      %1258 = vmatpush.msra.mxu0 0.0
      %1259 = vmatpush.msra.mxu0 0.0
      %1260 = vmatpush.msra.mxu0 0.0
      %1261 = vmatpush.msra.mxu0 0.0
      %1262 = vmatpush.msra.mxu0 0.0
      %1263 = vmatpush.msra.mxu0 0.0
      %1264 = vmatpush.msra.mxu0 0.0
      %1265 = vmatpush.msra.mxu0 0.0
      %1266 = vmatpush.msra.mxu0 0.0
      %1267 = vmatpush.msra.mxu0 0.0
      %1268 = vmatpush.msra.mxu0 0.0
      %1269 = vmatpush.msra.mxu0 0.0
      %1270 = vmatpush.msra.mxu0 %v1233
      %1271 = vmatpush.msra.mxu0 %v1230
      %1272 = vmatpush.msra.mxu0 %v1227
      %1273 = vmatpush.msra.mxu0 %v1224
      %1274 = vmatmul.f32.gmra.mxu0 %v1236
      %v1275 = vpop.f32.mrf.mxu0
      %v1276 = vadd.f32 0.0, %v1275
      %1277 = vdwg.mxu0
      %1278 = vmatpush.msra.mxu0 0.0
      %1279 = vmatpush.msra.mxu0 0.0
      %1280 = vmatpush.msra.mxu0 0.0
      %1281 = vmatpush.msra.mxu0 0.0
      %1282 = vmatpush.msra.mxu0 0.0
      %1283 = vmatpush.msra.mxu0 0.0
      %1284 = vmatpush.msra.mxu0 0.0
      %1285 = vmatpush.msra.mxu0 0.0
      %1286 = vmatpush.msra.mxu0 0.0
      %1287 = vmatpush.msra.mxu0 0.0
      %1288 = vmatpush.msra.mxu0 0.0
      %1289 = vmatpush.msra.mxu0 0.0
      %1290 = vmatpush.msra.mxu0 %v1234
      %1291 = vmatpush.msra.mxu0 %v1231
      %1292 = vmatpush.msra.mxu0 %v1228
      %1293 = vmatpush.msra.mxu0 %v1225
      %1294 = vmatmul.f32.gmra.mxu0 %v1236
      %v1295 = vpop.f32.mrf.mxu0
      %v1296 = vadd.f32 0.0, %v1295
      %1297 = vdwg.mxu0
      %v1298 = vmul.f32 %v1256, %v575
      %1299 = vmatpush.msra.mxu0 %v592
      %1300 = vmatpush.msra.mxu0 %v591
      %1301 = vmatpush.msra.mxu0 %v590
      %1302 = vmatpush.msra.mxu0 %v589
      %1303 = vmatpush.msra.mxu0 %v588
      %1304 = vmatpush.msra.mxu0 %v587
      %1305 = vmatpush.msra.mxu0 %v586
      %1306 = vmatpush.msra.mxu0 %v585
      %1307 = vmatpush.msra.mxu0 %v584
      %1308 = vmatpush.msra.mxu0 %v583
      %1309 = vmatpush.msra.mxu0 %v582
      %1310 = vmatpush.msra.mxu0 %v581
      %1311 = vmatpush.msra.mxu0 %v580
      %1312 = vmatpush.msra.mxu0 %v579
      %1313 = vmatpush.msra.mxu0 %v578
      %1314 = vmatpush.msra.mxu0 %v577
      %1315 = vmatmul.f32.gmra.mxu0 %v1256
      %v1316 = vpop.f32.mrf.mxu0
      %v1317 = vadd.f32 0.0, %v1316
      %1318 = vdwg.mxu0
      %v1319 = vmul.f32 %v1317, %v576
      %v1320 = vadd.f32 %v1298, %v1319
      %v1321 = vmul.f32 %v1276, %v575
      %1322 = vmatpush.msra.mxu0 %v592
      %1323 = vmatpush.msra.mxu0 %v591
      %1324 = vmatpush.msra.mxu0 %v590
      %1325 = vmatpush.msra.mxu0 %v589
      %1326 = vmatpush.msra.mxu0 %v588
      %1327 = vmatpush.msra.mxu0 %v587
      %1328 = vmatpush.msra.mxu0 %v586
      %1329 = vmatpush.msra.mxu0 %v585
      %1330 = vmatpush.msra.mxu0 %v584
      %1331 = vmatpush.msra.mxu0 %v583
      %1332 = vmatpush.msra.mxu0 %v582
      %1333 = vmatpush.msra.mxu0 %v581
      %1334 = vmatpush.msra.mxu0 %v580
      %1335 = vmatpush.msra.mxu0 %v579
      %1336 = vmatpush.msra.mxu0 %v578
      %1337 = vmatpush.msra.mxu0 %v577
      %1338 = vmatmul.f32.gmra.mxu0 %v1276
      %v1339 = vpop.f32.mrf.mxu0
      %v1340 = vadd.f32 0.0, %v1339
      %1341 = vdwg.mxu0
      %v1342 = vmul.f32 %v1340, %v576
      %v1343 = vadd.f32 %v1321, %v1342
      %v1344 = vmul.f32 %v1320, %v559
      %1345 = vmatpush.xpose.msra.mxu0 0.0
      %1346 = vmatpush.xpose.msra.mxu0 0.0
      %1347 = vmatpush.xpose.msra.mxu0 0.0
      %1348 = vmatpush.xpose.msra.mxu0 0.0
      %1349 = vmatpush.xpose.msra.mxu0 0.0
      %1350 = vmatpush.xpose.msra.mxu0 0.0
      %1351 = vmatpush.xpose.msra.mxu0 0.0
      %1352 = vmatpush.xpose.msra.mxu0 0.0
      %1353 = vmatpush.xpose.msra.mxu0 0.0
      %1354 = vmatpush.xpose.msra.mxu0 0.0
      %1355 = vmatpush.xpose.msra.mxu0 0.0
      %1356 = vmatpush.xpose.msra.mxu0 0.0
      %1357 = vmatpush.xpose.msra.mxu0 0.0
      %1358 = vmatpush.xpose.msra.mxu0 0.0
      %1359 = vmatpush.xpose.msra.mxu0 0.0
      %1360 = vmatpush.xpose.msra.mxu0 %v1343
      %1361 = vmatmul.f32.gmra.mxu0 %v1344
      %v1362 = vpop.f32.mrf.mxu0
      %v1363 = vadd.f32 0.0, %v1362
      %1364 = vdwg.mxu0
      %v1365 = vmul.f32 %v1363, 0.35355338
      %v1366 = vadd.f32 %v1365, %v554
      %v1367 = vsel %vm767, %v1366, -inf
      %1368 = vmax.xlane.f32.xlu0 %v1367
      %v1369 = vpop.xlane.xlu0 %1368
      %v1370 = vsub.f32 %v1366, %v1369
      %v1371 = vmul.f32 %v1370, 1.442695
      %v1372 = vpow.pop %v1371
      %v1373 = vsel %vm767, %v1372, 0.0
      %1374 = vadd.xlane.f32.xlu0 %v1373
      %v1375 = vpop.xlane.xlu0 %1374
      %v1376 = vrcp.pop %v1375
      %v1377 = vmul.f32 %v1375, %v1376
      %v1378 = vsub.f32 1.0, %v1377
      %v1379 = vmul.f32 %v1376, %v1378
      %v1380 = vadd.f32 %v1376, %v1379
      %vm1381 = vweird.f32 %v1375
      %vm1382 = vweird.f32 %v1376
      %vm1383 = vmor %vm1381, %vm1382
      %v1384 = vsel %vm1383, %v1376, %v1380
      %v1385 = vand.u32 2147483647, %v1375
      %vm1386 = vcmp.eq.f32.partialorder %v1385, 8.507059e+37
      %v1387 = vand.u32 %v1375, 2147483648
      %v1388 = vor.u32 1.1754944e-38, %v1387
      %v1389 = vsel %vm1386, %v1388, %v1384
      %v1390 = vmul.f32 %v1372, %v1389
      %v1391 = vmul.f32 %v1296, %v559
      %v1392 = vmul.f32 %v1320, %v564
      %1393 = vmatpush.xpose.msra.mxu0 0.0
      %1394 = vmatpush.xpose.msra.mxu0 0.0
      %1395 = vmatpush.xpose.msra.mxu0 0.0
      %1396 = vmatpush.xpose.msra.mxu0 0.0
      %1397 = vmatpush.xpose.msra.mxu0 0.0
      %1398 = vmatpush.xpose.msra.mxu0 0.0
      %1399 = vmatpush.xpose.msra.mxu0 0.0
      %1400 = vmatpush.xpose.msra.mxu0 0.0
      %1401 = vmatpush.xpose.msra.mxu0 0.0
      %1402 = vmatpush.xpose.msra.mxu0 0.0
      %1403 = vmatpush.xpose.msra.mxu0 0.0
      %1404 = vmatpush.xpose.msra.mxu0 0.0
      %1405 = vmatpush.xpose.msra.mxu0 0.0
      %1406 = vmatpush.xpose.msra.mxu0 0.0
      %1407 = vmatpush.xpose.msra.mxu0 0.0
      %1408 = vmatpush.xpose.msra.mxu0 %v1343
      %1409 = vmatmul.f32.gmra.mxu0 %v1392
      %v1410 = vpop.f32.mrf.mxu0
      %v1411 = vadd.f32 0.0, %v1410
      %1412 = vdwg.mxu0
      %v1413 = vmul.f32 %v1411, 0.35355338
      %v1414 = vadd.f32 %v1413, %v554
      %v1415 = vsel %vm767, %v1414, -inf
      %1416 = vmax.xlane.f32.xlu0 %v1415
      %v1417 = vpop.xlane.xlu0 %1416
      %v1418 = vsub.f32 %v1414, %v1417
      %v1419 = vmul.f32 %v1418, 1.442695
      %v1420 = vpow.pop %v1419
      %v1421 = vsel %vm767, %v1420, 0.0
      %1422 = vadd.xlane.f32.xlu0 %v1421
      %v1423 = vpop.xlane.xlu0 %1422
      %v1424 = vrcp.pop %v1423
      %v1425 = vmul.f32 %v1423, %v1424
      %v1426 = vsub.f32 1.0, %v1425
      %v1427 = vmul.f32 %v1424, %v1426
      %v1428 = vadd.f32 %v1424, %v1427
      %vm1429 = vweird.f32 %v1423
      %vm1430 = vweird.f32 %v1424
      %vm1431 = vmor %vm1429, %vm1430
      %v1432 = vsel %vm1431, %v1424, %v1428
      %v1433 = vand.u32 2147483647, %v1423
      %vm1434 = vcmp.eq.f32.partialorder %v1433, 8.507059e+37
      %v1435 = vand.u32 %v1423, 2147483648
      %v1436 = vor.u32 1.1754944e-38, %v1435
      %v1437 = vsel %vm1434, %v1436, %v1432
      %v1438 = vmul.f32 %v1420, %v1437
      %v1439 = vmul.f32 %v1296, %v564
      %v1441 = vsel %vm767, %v1438, 0
      %1443 = vmatpush.msra.mxu0 0.0
      %1444 = vmatpush.msra.mxu0 0.0
      %1445 = vmatpush.msra.mxu0 0.0
      %1446 = vmatpush.msra.mxu0 0.0
      %1447 = vmatpush.msra.mxu0 0.0
      %1448 = vmatpush.msra.mxu0 0.0
      %1449 = vmatpush.msra.mxu0 0.0
      %1450 = vmatpush.msra.mxu0 0.0
      %1451 = vmatpush.msra.mxu0 0.0
      %1452 = vmatpush.msra.mxu0 0.0
      %1453 = vmatpush.msra.mxu0 0.0
      %1454 = vmatpush.msra.mxu0 0.0
      %1455 = vmatpush.msra.mxu0 0.0
      %1456 = vmatpush.msra.mxu0 0.0
      %1457 = vmatpush.msra.mxu0 0.0
      %1458 = vmatpush.msra.mxu0 %v1439
      %1459 = vmatmul.f32.gmra.mxu0 %v1441
      %v1460 = vpop.f32.mrf.mxu0
      %v1461 = vadd.f32 0.0, %v1460
      %1462 = vdwg.mxu0
      %v1464 = vsel %vm767, %v1390, 0
      %1466 = vmatpush.msra.mxu0 0.0
      %1467 = vmatpush.msra.mxu0 0.0
      %1468 = vmatpush.msra.mxu0 0.0
      %1469 = vmatpush.msra.mxu0 0.0
      %1470 = vmatpush.msra.mxu0 0.0
      %1471 = vmatpush.msra.mxu0 0.0
      %1472 = vmatpush.msra.mxu0 0.0
      %1473 = vmatpush.msra.mxu0 0.0
      %1474 = vmatpush.msra.mxu0 0.0
      %1475 = vmatpush.msra.mxu0 0.0
      %1476 = vmatpush.msra.mxu0 0.0
      %1477 = vmatpush.msra.mxu0 0.0
      %1478 = vmatpush.msra.mxu0 0.0
      %1479 = vmatpush.msra.mxu0 0.0
      %1480 = vmatpush.msra.mxu0 0.0
      %1481 = vmatpush.msra.mxu0 %v1391
      %1482 = vmatmul.f32.gmra.mxu0 %v1464
      %v1483 = vpop.f32.mrf.mxu0
      %v1484 = vadd.f32 %v1461, %v1483
      %1485 = vdwg.mxu0
      %v1486 = vmul.f32 %v1320, %v569
      %1487 = vmatpush.xpose.msra.mxu0 0.0
      %1488 = vmatpush.xpose.msra.mxu0 0.0
      %1489 = vmatpush.xpose.msra.mxu0 0.0
      %1490 = vmatpush.xpose.msra.mxu0 0.0
      %1491 = vmatpush.xpose.msra.mxu0 0.0
      %1492 = vmatpush.xpose.msra.mxu0 0.0
      %1493 = vmatpush.xpose.msra.mxu0 0.0
      %1494 = vmatpush.xpose.msra.mxu0 0.0
      %1495 = vmatpush.xpose.msra.mxu0 0.0
      %1496 = vmatpush.xpose.msra.mxu0 0.0
      %1497 = vmatpush.xpose.msra.mxu0 0.0
      %1498 = vmatpush.xpose.msra.mxu0 0.0
      %1499 = vmatpush.xpose.msra.mxu0 0.0
      %1500 = vmatpush.xpose.msra.mxu0 0.0
      %1501 = vmatpush.xpose.msra.mxu0 0.0
      %1502 = vmatpush.xpose.msra.mxu0 %v1343
      %1503 = vmatmul.f32.gmra.mxu0 %v1486
      %v1504 = vpop.f32.mrf.mxu0
      %v1505 = vadd.f32 0.0, %v1504
      %1506 = vdwg.mxu0
      %v1507 = vmul.f32 %v1505, 0.35355338
      %v1508 = vadd.f32 %v1507, %v554
      %v1509 = vsel %vm767, %v1508, -inf
      %1510 = vmax.xlane.f32.xlu0 %v1509
      %v1511 = vpop.xlane.xlu0 %1510
      %v1512 = vsub.f32 %v1508, %v1511
      %v1513 = vmul.f32 %v1512, 1.442695
      %v1514 = vpow.pop %v1513
      %v1515 = vsel %vm767, %v1514, 0.0
      %1516 = vadd.xlane.f32.xlu0 %v1515
      %v1517 = vpop.xlane.xlu0 %1516
      %v1518 = vrcp.pop %v1517
      %v1519 = vmul.f32 %v1517, %v1518
      %v1520 = vsub.f32 1.0, %v1519
      %v1521 = vmul.f32 %v1518, %v1520
      %v1522 = vadd.f32 %v1518, %v1521
      %vm1523 = vweird.f32 %v1517
      %vm1524 = vweird.f32 %v1518
      %vm1525 = vmor %vm1523, %vm1524
      %v1526 = vsel %vm1525, %v1518, %v1522
      %v1527 = vand.u32 2147483647, %v1517
      %vm1528 = vcmp.eq.f32.partialorder %v1527, 8.507059e+37
      %v1529 = vand.u32 %v1517, 2147483648
      %v1530 = vor.u32 1.1754944e-38, %v1529
      %v1531 = vsel %vm1528, %v1530, %v1526
      %v1532 = vmul.f32 %v1514, %v1531
      %v1533 = vmul.f32 %v1296, %v569
      %v1535 = vsel %vm767, %v1532, 0
      %1537 = vmatpush.msra.mxu0 0.0
      %1538 = vmatpush.msra.mxu0 0.0
      %1539 = vmatpush.msra.mxu0 0.0
      %1540 = vmatpush.msra.mxu0 0.0
      %1541 = vmatpush.msra.mxu0 0.0
      %1542 = vmatpush.msra.mxu0 0.0
      %1543 = vmatpush.msra.mxu0 0.0
      %1544 = vmatpush.msra.mxu0 0.0
      %1545 = vmatpush.msra.mxu0 0.0
      %1546 = vmatpush.msra.mxu0 0.0
      %1547 = vmatpush.msra.mxu0 0.0
      %1548 = vmatpush.msra.mxu0 0.0
      %1549 = vmatpush.msra.mxu0 0.0
      %1550 = vmatpush.msra.mxu0 0.0
      %1551 = vmatpush.msra.mxu0 0.0
      %1552 = vmatpush.msra.mxu0 %v1533
      %1553 = vmatmul.f32.gmra.mxu0 %v1535
      %v1554 = vpop.f32.mrf.mxu0
      %v1555 = vadd.f32 0.0, %v1554
      %1556 = vdwg.mxu0
      %v1557 = vadd.f32 %v1484, %v1555
      %v1558 = vmul.f32 %v1320, %v574
      %1559 = vmatpush.xpose.msra.mxu0 0.0
      %1560 = vmatpush.xpose.msra.mxu0 0.0
      %1561 = vmatpush.xpose.msra.mxu0 0.0
      %1562 = vmatpush.xpose.msra.mxu0 0.0
      %1563 = vmatpush.xpose.msra.mxu0 0.0
      %1564 = vmatpush.xpose.msra.mxu0 0.0
      %1565 = vmatpush.xpose.msra.mxu0 0.0
      %1566 = vmatpush.xpose.msra.mxu0 0.0
      %1567 = vmatpush.xpose.msra.mxu0 0.0
      %1568 = vmatpush.xpose.msra.mxu0 0.0
      %1569 = vmatpush.xpose.msra.mxu0 0.0
      %1570 = vmatpush.xpose.msra.mxu0 0.0
      %1571 = vmatpush.xpose.msra.mxu0 0.0
      %1572 = vmatpush.xpose.msra.mxu0 0.0
      %1573 = vmatpush.xpose.msra.mxu0 0.0
      %1574 = vmatpush.xpose.msra.mxu0 %v1343
      %1575 = vmatmul.f32.gmra.mxu0 %v1558
      %v1576 = vpop.f32.mrf.mxu0
      %v1577 = vadd.f32 0.0, %v1576
      %1578 = vdwg.mxu0
      %v1579 = vmul.f32 %v1577, 0.35355338
      %v1580 = vadd.f32 %v1579, %v554
      %v1581 = vsel %vm767, %v1580, -inf
      %1582 = vmax.xlane.f32.xlu0 %v1581
      %v1583 = vpop.xlane.xlu0 %1582
      %v1584 = vsub.f32 %v1580, %v1583
      %v1585 = vmul.f32 %v1584, 1.442695
      %v1586 = vpow.pop %v1585
      %v1587 = vsel %vm767, %v1586, 0.0
      %1588 = vadd.xlane.f32.xlu0 %v1587
      %v1589 = vpop.xlane.xlu0 %1588
      %v1590 = vrcp.pop %v1589
      %v1591 = vmul.f32 %v1589, %v1590
      %v1592 = vsub.f32 1.0, %v1591
      %v1593 = vmul.f32 %v1590, %v1592
      %v1594 = vadd.f32 %v1590, %v1593
      %vm1595 = vweird.f32 %v1589
      %vm1596 = vweird.f32 %v1590
      %vm1597 = vmor %vm1595, %vm1596
      %v1598 = vsel %vm1597, %v1590, %v1594
      %v1599 = vand.u32 2147483647, %v1589
      %vm1600 = vcmp.eq.f32.partialorder %v1599, 8.507059e+37
      %v1601 = vand.u32 %v1589, 2147483648
      %v1602 = vor.u32 1.1754944e-38, %v1601
      %v1603 = vsel %vm1600, %v1602, %v1598
      %v1604 = vmul.f32 %v1586, %v1603
      %v1605 = vmul.f32 %v1296, %v574
      %v1607 = vsel %vm767, %v1604, 0
      %1609 = vmatpush.msra.mxu0 0.0
      %1610 = vmatpush.msra.mxu0 0.0
      %1611 = vmatpush.msra.mxu0 0.0
      %1612 = vmatpush.msra.mxu0 0.0
      %1613 = vmatpush.msra.mxu0 0.0
      %1614 = vmatpush.msra.mxu0 0.0
      %1615 = vmatpush.msra.mxu0 0.0
      %1616 = vmatpush.msra.mxu0 0.0
      %1617 = vmatpush.msra.mxu0 0.0
      %1618 = vmatpush.msra.mxu0 0.0
      %1619 = vmatpush.msra.mxu0 0.0
      %1620 = vmatpush.msra.mxu0 0.0
      %1621 = vmatpush.msra.mxu0 0.0
      %1622 = vmatpush.msra.mxu0 0.0
      %1623 = vmatpush.msra.mxu0 0.0
      %1624 = vmatpush.msra.mxu0 %v1605
      %1625 = vmatmul.f32.gmra.mxu0 %v1607
      %v1626 = vpop.f32.mrf.mxu0
      %v1627 = vadd.f32 0.0, %v1626
      %1628 = vdwg.mxu0
      %v1629 = vadd.f32 %v1557, %v1627
      %s1630 = scalar_lea.vmem %s8, 128
      %v1631 = vld [vmem:[%s1630] sm:$0xff]
      %v1632 = vld [vmem:[%s1630 + $0x8] sm:$0xff]
      %v1633 = vld [vmem:[%s1630 + $0x10] sm:$0xff]
      %v1634 = vld [vmem:[%s1630 + $0x18] sm:$0xff]
      %v1635 = vld [vmem:[%s1630 + $0x20] sm:$0xff]
      %v1636 = vld [vmem:[%s1630 + $0x28] sm:$0xff]
      %v1637 = vld [vmem:[%s1630 + $0x30] sm:$0xff]
      %v1638 = vld [vmem:[%s1630 + $0x38] sm:$0xff]
      %v1639 = vld [vmem:[%s1630 + $0x40] sm:$0xff]
      %v1640 = vld [vmem:[%s1630 + $0x48] sm:$0xff]
      %v1641 = vld [vmem:[%s1630 + $0x50] sm:$0xff]
      %v1642 = vld [vmem:[%s1630 + $0x58] sm:$0xff]
      %v1643 = vld [vmem:[%s1630 + $0x60] sm:$0xff]
      %v1644 = vld [vmem:[%s1630 + $0x68] sm:$0xff]
      %v1645 = vld [vmem:[%s1630 + $0x70] sm:$0xff]
      %v1646 = vld [vmem:[%s1630 + $0x78] sm:$0xff]
      %1647 = vmatpush.msra.mxu0 %v1646
      %1648 = vmatpush.msra.mxu0 %v1645
      %1649 = vmatpush.msra.mxu0 %v1644
      %1650 = vmatpush.msra.mxu0 %v1643
      %1651 = vmatpush.msra.mxu0 %v1642
      %1652 = vmatpush.msra.mxu0 %v1641
      %1653 = vmatpush.msra.mxu0 %v1640
      %1654 = vmatpush.msra.mxu0 %v1639
      %1655 = vmatpush.msra.mxu0 %v1638
      %1656 = vmatpush.msra.mxu0 %v1637
      %1657 = vmatpush.msra.mxu0 %v1636
      %1658 = vmatpush.msra.mxu0 %v1635
      %1659 = vmatpush.msra.mxu0 %v1634
      %1660 = vmatpush.msra.mxu0 %v1633
      %1661 = vmatpush.msra.mxu0 %v1632
      %1662 = vmatpush.msra.mxu0 %v1631
      %1663 = vmatmul.f32.gmra.mxu0 %v1629
      %v1664 = vpop.f32.mrf.mxu0
      %v1665 = vadd.f32 0.0, %v1664
      %1666 = vdwg.mxu0
      %v1667 = vadd.f32 %v1198, %v1665
      %s1668 = scalar_lea.vmem %s9, 1
      %v1669 = vld [vmem:[%s1668] sm:$0x1]
      %v1670 = vmul.f32 %v1667, %v1667
      %v1671 = vsel %vm595, %v1670, 0.0
      %1672 = vadd.xlane.f32.xlu0 %v1671
      %v1673 = vpop.xlane.xlu0 %1672
      %v1674 = vmul.f32 %v1673, %v605
      %v1675 = vadd.f32 %v1674, 1e-06
      %v1676 = vrsqrt.pop %v1675
      %v1677 = vmul.f32 %v1676, %v1675
      %v1678 = vmul.f32 %v1677, %v1676
      %v1679 = vmul.f32 0.5, %v1678
      %v1680 = vsub.f32 1.5, %v1679
      %v1681 = vmul.f32 %v1676, %v1680
      %vm1682 = vweird.f32 %v1675
      %vm1683 = vweird.f32 %v1676
      %vm1684 = vmor %vm1682, %vm1683
      %v1685 = vsel %vm1684, %v1676, %v1681
      %v1686 = vmul.f32 %v1667, %v1685
      %v1688 = vperm.slane %v1669, 0
      %v1690 = vmul.f32 %v1686, %v1688
      %s1691 = scalar_lea.vmem %s10, 64
      %v1692 = vld [vmem:[%s1691] sm:$0xff]
      %v1693 = vld [vmem:[%s1691 + $0x8] sm:$0xff]
      %v1694 = vld [vmem:[%s1691 + $0x10] sm:$0xff]
      %v1695 = vld [vmem:[%s1691 + $0x18] sm:$0xff]
      %v1696 = vld [vmem:[%s1691 + $0x20] sm:$0xff]
      %v1697 = vld [vmem:[%s1691 + $0x28] sm:$0xff]
      %v1698 = vld [vmem:[%s1691 + $0x30] sm:$0xff]
      %v1699 = vld [vmem:[%s1691 + $0x38] sm:$0xff]
      %v1701 = vsel %vm595, %v1690, 0
      %1703 = vmatpush.msra.mxu0 0.0
      %1704 = vmatpush.msra.mxu0 0.0
      %1705 = vmatpush.msra.mxu0 0.0
      %1706 = vmatpush.msra.mxu0 0.0
      %1707 = vmatpush.msra.mxu0 0.0
      %1708 = vmatpush.msra.mxu0 0.0
      %1709 = vmatpush.msra.mxu0 0.0
      %1710 = vmatpush.msra.mxu0 0.0
      %1711 = vmatpush.msra.mxu0 0.0
      %1712 = vmatpush.msra.mxu0 0.0
      %1713 = vmatpush.msra.mxu0 0.0
      %1714 = vmatpush.msra.mxu0 0.0
      %1715 = vmatpush.msra.mxu0 %v1698
      %1716 = vmatpush.msra.mxu0 %v1696
      %1717 = vmatpush.msra.mxu0 %v1694
      %1718 = vmatpush.msra.mxu0 %v1692
      %1719 = vmatmul.f32.gmra.mxu0 %v1701
      %v1720 = vpop.f32.mrf.mxu0
      %v1721 = vadd.f32 0.0, %v1720
      %1722 = vdwg.mxu0
      %1723 = vmatpush.msra.mxu0 0.0
      %1724 = vmatpush.msra.mxu0 0.0
      %1725 = vmatpush.msra.mxu0 0.0
      %1726 = vmatpush.msra.mxu0 0.0
      %1727 = vmatpush.msra.mxu0 0.0
      %1728 = vmatpush.msra.mxu0 0.0
      %1729 = vmatpush.msra.mxu0 0.0
      %1730 = vmatpush.msra.mxu0 0.0
      %1731 = vmatpush.msra.mxu0 0.0
      %1732 = vmatpush.msra.mxu0 0.0
      %1733 = vmatpush.msra.mxu0 0.0
      %1734 = vmatpush.msra.mxu0 0.0
      %1735 = vmatpush.msra.mxu0 %v1699
      %1736 = vmatpush.msra.mxu0 %v1697
      %1737 = vmatpush.msra.mxu0 %v1695
      %1738 = vmatpush.msra.mxu0 %v1693
      %1739 = vmatmul.f32.gmra.mxu0 %v1701
      %v1740 = vpop.f32.mrf.mxu0
      %v1741 = vadd.f32 0.0, %v1740
      %1742 = vdwg.mxu0
      %v1743 = vxor.u32 %v1721, 2147483648
      %v1744 = vmul.f32 %v1743, 1.442695
      %v1745 = vpow.pop %v1744
      %v1746 = vadd.f32 %v1745, 1.0
      %v1747 = vrcp.pop %v1746
      %v1748 = vmul.f32 %v1746, %v1747
      %v1749 = vsub.f32 1.0, %v1748
      %v1750 = vmul.f32 %v1747, %v1749
      %v1751 = vadd.f32 %v1747, %v1750
      %vm1752 = vweird.f32 %v1746
      %vm1753 = vweird.f32 %v1747
      %vm1754 = vmor %vm1752, %vm1753
      %v1755 = vsel %vm1754, %v1747, %v1751
      %v1756 = vand.u32 2147483647, %v1746
      %vm1757 = vcmp.eq.f32.partialorder %v1756, 8.507059e+37
      %v1758 = vand.u32 %v1746, 2147483648
      %v1759 = vor.u32 1.1754944e-38, %v1758
      %v1760 = vsel %vm1757, %v1759, %v1755
      %v1761 = vmul.f32 1.0, %v1760
      %v1762 = vmul.f32 %v1721, %v1761
      %v1763 = vmul.f32 %v1762, %v1741
      %s1764 = scalar_lea.vmem %s11, 128
      %v1765 = vld [vmem:[%s1764] sm:$0xff]
      %v1766 = vld [vmem:[%s1764 + $0x8] sm:$0xff]
      %v1767 = vld [vmem:[%s1764 + $0x10] sm:$0xff]
      %v1768 = vld [vmem:[%s1764 + $0x18] sm:$0xff]
      %v1769 = vld [vmem:[%s1764 + $0x20] sm:$0xff]
      %v1770 = vld [vmem:[%s1764 + $0x28] sm:$0xff]
      %v1771 = vld [vmem:[%s1764 + $0x30] sm:$0xff]
      %v1772 = vld [vmem:[%s1764 + $0x38] sm:$0xff]
      %v1773 = vld [vmem:[%s1764 + $0x40] sm:$0xff]
      %v1774 = vld [vmem:[%s1764 + $0x48] sm:$0xff]
      %v1775 = vld [vmem:[%s1764 + $0x50] sm:$0xff]
      %v1776 = vld [vmem:[%s1764 + $0x58] sm:$0xff]
      %v1777 = vld [vmem:[%s1764 + $0x60] sm:$0xff]
      %v1778 = vld [vmem:[%s1764 + $0x68] sm:$0xff]
      %v1779 = vld [vmem:[%s1764 + $0x70] sm:$0xff]
      %v1780 = vld [vmem:[%s1764 + $0x78] sm:$0xff]
      %1781 = vmatpush.msra.mxu0 %v1780
      %1782 = vmatpush.msra.mxu0 %v1779
      %1783 = vmatpush.msra.mxu0 %v1778
      %1784 = vmatpush.msra.mxu0 %v1777
      %1785 = vmatpush.msra.mxu0 %v1776
      %1786 = vmatpush.msra.mxu0 %v1775
      %1787 = vmatpush.msra.mxu0 %v1774
      %1788 = vmatpush.msra.mxu0 %v1773
      %1789 = vmatpush.msra.mxu0 %v1772
      %1790 = vmatpush.msra.mxu0 %v1771
      %1791 = vmatpush.msra.mxu0 %v1770
      %1792 = vmatpush.msra.mxu0 %v1769
      %1793 = vmatpush.msra.mxu0 %v1768
      %1794 = vmatpush.msra.mxu0 %v1767
      %1795 = vmatpush.msra.mxu0 %v1766
      %1796 = vmatpush.msra.mxu0 %v1765
      %1797 = vmatmul.f32.gmra.mxu0 %v1763
      %v1798 = vpop.f32.mrf.mxu0
      %v1799 = vadd.f32 0.0, %v1798
      %1800 = vdwg.mxu0
      %v1801 = vadd.f32 %v1667, %v1799
      %v1802 = vld [vmem:[%s12] sm:$0x1]
      %v1803 = vmul.f32 %v1801, %v1801
      %v1804 = vsel %vm595, %v1803, 0.0
      %1805 = vadd.xlane.f32.xlu0 %v1804
      %v1806 = vpop.xlane.xlu0 %1805
      %v1807 = vmul.f32 %v1806, %v605
      %v1808 = vadd.f32 %v1807, 1e-06
      %v1809 = vrsqrt.pop %v1808
      %v1810 = vmul.f32 %v1809, %v1808
      %v1811 = vmul.f32 %v1810, %v1809
      %v1812 = vmul.f32 0.5, %v1811
      %v1813 = vsub.f32 1.5, %v1812
      %v1814 = vmul.f32 %v1809, %v1813
      %vm1815 = vweird.f32 %v1808
      %vm1816 = vweird.f32 %v1809
      %vm1817 = vmor %vm1815, %vm1816
      %v1818 = vsel %vm1817, %v1809, %v1814
      %v1819 = vmul.f32 %v1801, %v1818
      %v1821 = vperm.slane %v1802, 0
      %v1823 = vmul.f32 %v1819, %v1821
      %v1824 = vld [vmem:[%s13] sm:$0xff]
      %v1825 = vld [vmem:[%s13 + $0x8] sm:$0xff]
      %v1826 = vld [vmem:[%s13 + $0x10] sm:$0xff]
      %v1827 = vld [vmem:[%s13 + $0x18] sm:$0xff]
      %v1828 = vld [vmem:[%s14] sm:$0x1]
      %v1830 = vperm.slane %v1828, 0
      %v1833 = vsel %vm595, %v1823, 0
      %1835 = vmatpush.msra.mxu0 0.0
      %1836 = vmatpush.msra.mxu0 0.0
      %1837 = vmatpush.msra.mxu0 0.0
      %1838 = vmatpush.msra.mxu0 0.0
      %1839 = vmatpush.msra.mxu0 0.0
      %1840 = vmatpush.msra.mxu0 0.0
      %1841 = vmatpush.msra.mxu0 0.0
      %1842 = vmatpush.msra.mxu0 0.0
      %1843 = vmatpush.msra.mxu0 0.0
      %1844 = vmatpush.msra.mxu0 0.0
      %1845 = vmatpush.msra.mxu0 0.0
      %1846 = vmatpush.msra.mxu0 0.0
      %1847 = vmatpush.msra.mxu0 %v1827
      %1848 = vmatpush.msra.mxu0 %v1826
      %1849 = vmatpush.msra.mxu0 %v1825
      %1850 = vmatpush.msra.mxu0 %v1824
      %1851 = vmatmul.f32.gmra.mxu0 %v1833
      %v1852 = vpop.f32.mrf.mxu0
      %v1853 = vadd.f32 %v1830, %v1852
      %1854 = vdwg.mxu0
      %1855 = vst [vmem:[%s503] sm:$0xff] %v1853
      %p1856 = scmp.lt.s32.totalorder %s26, 1
      %s1857 = scalar_select %p1856, %s26, 1
      %s1858 = smul.addr %s1857, 8
      %s1859 = scalar_lea.vmem %s15, %s1858
      // Predicated region
      $region81: #{forward.1} parent=79 // pred_check
        %p1860 = pneg %p369
      $region82: #{forward.1} parent=79 // pred_check_branch
        %1862 = sbr.rel (%p1860) target = $region84
      $region83: #{forward.1} parent=79 // pred_region
        _
      $region84: #{forward.1} parent=79 // pred_fallthru
        _
    $region80: #{forward.1} parent=5 // pred_fallthru
      _
    %p1863 = scmp.le.s32.totalorder 2, %s21
    // Predicated region
    $region85: #{forward.1} parent=5 // pred_check
      %p1864 = pneg %p1863
    $region86: #{forward.1} parent=5 // pred_check_branch
      %1866 = sbr.rel (%p1864) target = $region88
    $region87: #{forward.1} parent=5 // pred_region
      %s1867 = ssub.s32 %s21, 2
      // Predicated region
      $region89: #{forward.1} parent=87 // pred_check
        %p1868 = pneg %p375
      $region90: #{forward.1} parent=87 // pred_check_branch
        %1870 = sbr.rel (%p1868) target = $region92
      $region91: #{forward.1} parent=87 // pred_region
        %p1871 = scmp.lt.s32.totalorder %s27, 1
        %s1872 = scalar_select %p1871, %s27, 1
        %s1873 = smul.addr %s1872, 8
        %s1874 = scalar_lea.vmem %s15, %s1873
      $region92: #{forward.1} parent=87 // pred_fallthru
        _
    $region88: #{forward.1} parent=5 // pred_fallthru
      _
  $region6: #{forward.1} parent=0 // loop_footer
    %s25 = sadd.s32 1, %s21
  $region7: #{forward.1} parent=0 // loop_footer_branch
    %20 = sbr.rel target = $region3
  $region8: #{forward.1} parent=0 // loop_exit
    _

</llo_original>
